<compile_context>
chip_gen: v7x
topology: tpu7x:2x2x1
jax: 0.10.0
libtpu: 0.0.40
codegen_flags: <defaults>
</compile_context>

<pallas_src>
import math

import jax
import jax.numpy as jnp
from jax.experimental import pallas as pl
from jax.experimental.pallas import tpu as pltpu


def _make_proj_softmax_kernel(nv, tile_v):
    """Fused (x @ W + b) + numerically-stable softmax over a resident row block.

    Grid is (row_tiles, nv); the (tile_m, V) output block is resident across
    the vocab axis.  Scratch ``mtab_ref`` is (tile_m, nv) and holds the local
    row max of each vocab step.
    """

    def kernel(x_ref, w_ref, b_ref, o_ref, mtab_ref):
        j = pl.program_id(1)

        @pl.when(j == 0)
        def _init():
            mtab_ref[...] = jnp.full(mtab_ref.shape, -jnp.inf, mtab_ref.dtype)

        # bf16 x bf16 -> f32 accumulation on the MXU; bias add in f32.
        logits = jnp.dot(x_ref[...], w_ref[...],
                         preferred_element_type=jnp.float32) + b_ref[...]

        # Exponentiate against this step's LOCAL max now so the big exp work
        # runs under the weight-stream DMA instead of serialized in the tail.
        m_j = jnp.max(logits, axis=-1, keepdims=True)            # (tile_m, 1)
        start = pl.multiple_of(j * tile_v, 128)
        o_ref[:, pl.ds(start, tile_v)] = jnp.exp(logits - m_j)

        # Record the local max in column j of the (tile_m, nv) table.
        # One-hot select avoids a dynamic lane-indexed store.
        col = jax.lax.broadcasted_iota(jnp.int32, mtab_ref.shape, 1)
        mtab_ref[...] = jnp.where(col == j, m_j, mtab_ref[...])

        @pl.when(j == nv - 1)
        def _finalize():
            m_all = mtab_ref[...]                                 # (tile_m, nv)
            m_fin = jnp.max(m_all, axis=-1, keepdims=True)        # (tile_m, 1)
            corr = jnp.exp(m_all - m_fin)                         # (tile_m, nv)

            # Pass 1: denominator, correcting each block's local max.
            denom = jnp.zeros_like(m_fin)
            for jj in range(nv):                                  # static unroll
                blk = o_ref[:, jj * tile_v:(jj + 1) * tile_v]
                denom = denom + corr[:, jj:jj + 1] * jnp.sum(
                    blk, axis=-1, keepdims=True)

            # Exact f32 divide of the (tile_m, 1) denominator: restores
            # f32-accurate row normalization (approx reciprocal was ~2e-3 off).
            inv = 1.0 / denom

            # Pass 2: scale every resident block by exp(m_j - m_fin) / denom.
            for jj in range(nv):
                scale = corr[:, jj:jj + 1] * inv
                o_ref[:, jj * tile_v:(jj + 1) * tile_v] = (
                    o_ref[:, jj * tile_v:(jj + 1) * tile_v] * scale)

    return kernel


def _proj_logits_kernel(x_ref, w_ref, b_ref, o_ref):
    """softmax=False path: tiled projection, f32 accumulation."""
    o_ref[...] = (jnp.dot(x_ref[...], w_ref[...],
                          preferred_element_type=jnp.float32)
                  + b_ref[...]).astype(o_ref.dtype)


def llama_logprob(embed, weight_t, bias, *, softmax=True, tile_m=256,
                  tile_v=1280, vmem_limit_bytes=None):
    """embed: (B, K); weight_t: (K, V) = nn.Linear weight pre-transposed to
    (in, out) layout -- store it in bf16 so no per-call cast of the 262 MB
    weight is needed; bias: (V,).  Returns (B, V) f32 probs (or logits).

    Tile / VMEM guidance for the real 4096->32000 projection:
      v5e/v6e: tile_m=256-512, tile_v=1280-1600, vmem_limit_bytes ~100 MiB.
      v7x:     tile_m=128-256, tile_v=1280,      vmem_limit_bytes ~56-60 MiB.
    """
    B, K = embed.shape
    Kw, V = weight_t.shape
    assert K == Kw, (K, Kw)
    assert tile_v % 128 == 0 and V % tile_v == 0, (V, tile_v)
    assert tile_m % 16 == 0, tile_m          # bf16 sublane packing minimum

    # Prefer a row tile that divides B exactly: slicing off padded rows would
    # materialize an extra full (B, V) f32 copy of an HBM-bound output.
    if B % tile_m != 0:
        cand = min(tile_m, (B // 16) * 16)
        while cand >= 16 and B % cand != 0:
            cand -= 16
        tile_m = cand if cand >= 16 else 16
    B_pad = ((B + tile_m - 1) // tile_m) * tile_m
    if B_pad != B:
        # TODO(synk): mask padded rows in-kernel instead of slicing afterwards.
        embed = jnp.pad(embed, ((0, B_pad - B), (0, 0)))

    # bf16 operands for the MXU.  The weight should already be bf16 (stored
    # that way by the caller); only cast if it is not.
    x = embed if embed.dtype == jnp.bfloat16 else embed.astype(jnp.bfloat16)
    w = weight_t if weight_t.dtype == jnp.bfloat16 else weight_t.astype(jnp.bfloat16)
    b2 = bias.astype(jnp.float32).reshape(1, V)

    nv = V // tile_v
    nrow = B_pad // tile_m

    def _compiler_params(dimension_semantics):
        kwargs = dict(dimension_semantics=dimension_semantics)
        if vmem_limit_bytes is not None:
            kwargs["vmem_limit_bytes"] = vmem_limit_bytes
        return pltpu.CompilerParams(**kwargs)

    if softmax:
        kernel = _make_proj_softmax_kernel(nv, tile_v)

        def _call(single_buffer_out):
            if single_buffer_out:
                # The resident row block is written back only once per sweep,
                # so double-buffering the single largest VMEM allocation
                # (tile_m*V*4 B) buys <7% overlap -- single-buffer it and
                # spend the VMEM on bigger tile_m / tile_v instead.
                out_spec = pl.BlockSpec((tile_m, V), lambda i, j: (i, 0),
                                        pipeline_mode=pl.Buffered(1))
            else:
                out_spec = pl.BlockSpec((tile_m, V), lambda i, j: (i, 0))
            return pl.pallas_call(
                kernel,
                out_shape=jax.ShapeDtypeStruct((B_pad, V), jnp.float32),
                grid_spec=pltpu.PrefetchScalarGridSpec(
                    num_scalar_prefetch=0,
                    grid=(nrow, nv),
                    in_specs=[
                        pl.BlockSpec((tile_m, K), lambda i, j: (i, 0)),  # rows (resident over j)
                        pl.BlockSpec((K, tile_v), lambda i, j: (0, j)),  # streamed weight tile
                        pl.BlockSpec((1, tile_v), lambda i, j: (0, j)),  # bias tile
                    ],
                    out_specs=out_spec,
                    scratch_shapes=[pltpu.VMEM((tile_m, nv), jnp.float32)],
                ),
                compiler_params=_compiler_params(("parallel", "arbitrary")),
            )(x, w, b2)

        try:
            out = _call(True)
        except Exception:  # pragma: no cover - JAX without pipeline_mode support
            out = _call(False)
        # TODO(synk): two-pass vocab-outer softmax for very large B (>~4 row
        # tiles) so the weight streams once total instead of once per row tile.
    else:
        # Vocab axis OUTER, rows inner: the weight block index depends only on
        # the outer axis, so each (K, tile_v) weight tile is DMA'd from HBM
        # exactly once and stays resident across the whole row sweep.
        out = pl.pallas_call(
            _proj_logits_kernel,
            out_shape=jax.ShapeDtypeStruct((B_pad, V), jnp.float32),
            grid_spec=pltpu.PrefetchScalarGridSpec(
                num_scalar_prefetch=0,
                grid=(nv, nrow),
                in_specs=[
                    pl.BlockSpec((tile_m, K), lambda j, i: (i, 0)),
                    pl.BlockSpec((K, tile_v), lambda j, i: (0, j)),
                    pl.BlockSpec((1, tile_v), lambda j, i: (0, j)),
                ],
                out_specs=pl.BlockSpec((tile_m, tile_v), lambda j, i: (i, j)),
            ),
            compiler_params=_compiler_params(("parallel", "parallel")),
        )(x, w, b2)

    # TODO(synk): optional int8 (v5e/v6e) / fp8 (v7x) weight quantization with
    # per-channel scales to halve the dominant weight HBM stream.
    return out if B_pad == B else out[:B]


if __name__ == "__main__":
    # Small stand-ins for the real (B, 4096) -> (B, 32000) projection.
    B, K, V = 32, 256, 1024
    tile_m, tile_v = 16, 256      # real shapes: see guidance in llama_logprob

    key = jax.random.PRNGKey(0)
    k_x, k_w, k_b = jax.random.split(key, 3)

    embed = jax.random.normal(k_x, (B, K), dtype=jnp.float32)
    # Deterministic nn.Linear-style params (kaiming-uniform bound).
    bound = 1.0 / math.sqrt(K)
    weight = jax.random.uniform(k_w, (V, K), dtype=jnp.float32,
                                minval=-bound, maxval=bound)     # (out, in)
    bias = jax.random.uniform(k_b, (V,), dtype=jnp.float32,
                              minval=-bound, maxval=bound)

    # Store the (in, out)-layout weight in bf16 ONCE, outside the call, so the
    # kernel never pays a 512 MB f32 -> 262 MB bf16 cast per invocation.
    weight_t = weight.T.astype(jnp.bfloat16)                     # (K, V)

    probs = llama_logprob(embed, weight_t, bias, softmax=True,
                          tile_m=tile_m, tile_v=tile_v)
    probs = jax.block_until_ready(probs)
    logits = llama_logprob(embed, weight_t, bias, softmax=False,
                           tile_m=tile_m, tile_v=tile_v)
    logits = jax.block_until_ready(logits)

    # Reference with the same bf16 operand dtypes (f32 accumulation).
    ref_logits = jnp.dot(embed.astype(jnp.bfloat16), weight_t,
                         preferred_element_type=jnp.float32) + bias
    ref_probs = jax.nn.softmax(ref_logits, axis=-1)

    assert probs.shape == (B, V) and logits.shape == (B, V)
    assert jnp.allclose(logits, ref_logits, atol=1e-3, rtol=1e-3)
    assert jnp.allclose(probs, ref_probs, atol=1e-5, rtol=1e-3)
    # Exact f32 divide of the denominator -> rows sum to 1 to f32 accuracy.
    assert jnp.allclose(jnp.sum(probs, axis=-1), 1.0, atol=1e-4)

    print("KERNEL_OK")
</pallas_src>

<mosaic_0001>
module attributes {stable_mosaic.version = 11 : i64} {
  func.func @kernel(%arg0: i32, %arg1: i32, %arg2: memref<16x256xbf16, #tpu.memory_space<vmem>>, %arg3: memref<256x256xbf16, #tpu.memory_space<vmem>>, %arg4: memref<1x256xf32, #tpu.memory_space<vmem>>, %arg5: memref<16x1024xf32, #tpu.memory_space<vmem>>, %arg6: memref<16x4xf32, #tpu.memory_space<vmem>>) attributes {dimension_semantics = [#tpu.dimension_semantics<parallel>, #tpu.dimension_semantics<arbitrary>], iteration_bounds = array<i64: 2, 4>, scalar_prefetch = 0 : i64, scratch_operands = 1 : i64, tpu.core_type = #tpu.core_type<tc>, window_params = [{transform_indices = @transform_0, window_bounds = array<i64: 16, 256>}, {transform_indices = @transform_1, window_bounds = array<i64: 256, 256>}, {transform_indices = @transform_2, window_bounds = array<i64: 1, 256>}, {pipeline_mode = #tpu.pipeline_mode<synchronous>, transform_indices = @transform_3, window_bounds = array<i64: 16, 1024>}]} {
    %c0_i32 = arith.constant 0 : i32
    %0 = arith.cmpi eq, %arg1, %c0_i32 : i32
    %1 = arith.extui %0 : i1 to i32
    %c0_i32_0 = arith.constant 0 : i32
    %2 = arith.cmpi ne, %1, %c0_i32_0 : i32
    scf.if %2 {
      %cst_13 = arith.constant 0xFF800000 : f32
      %29 = vector.broadcast %cst_13 : f32 to vector<16x4xf32>
      %c0_14 = arith.constant 0 : index
      %c0_15 = arith.constant 0 : index
      %30 = vector.load %arg6[%c0_14, %c0_15] : memref<16x4xf32, #tpu.memory_space<vmem>>, vector<16x4xf32>
      tpu.vector_store %arg6[%c0_14, %c0_15], %29 {strides = array<i32>} : memref<16x4xf32, #tpu.memory_space<vmem>>, vector<16x4xf32>,
    } else {
    }
    %c0 = arith.constant 0 : index
    %c0_1 = arith.constant 0 : index
    %3 = vector.load %arg2[%c0, %c0_1] : memref<16x256xbf16, #tpu.memory_space<vmem>>, vector<16x256xbf16>
    %c0_2 = arith.constant 0 : index
    %c0_3 = arith.constant 0 : index
    %4 = vector.load %arg3[%c0_2, %c0_3] : memref<256x256xbf16, #tpu.memory_space<vmem>>, vector<256x256xbf16>
    %cst = arith.constant dense<0.000000e+00> : vector<16x256xf32>
    %5 = tpu.matmul %3, %4, %cst {dimension_numbers = #tpu.dot_dimension_numbers<[1], [0], [0], [1], [0, 0, 1, 1], [], []>} : vector<16x256xbf16>, vector<256x256xbf16>, vector<16x256xf32> -> vector<16x256xf32>
    %c0_4 = arith.constant 0 : index
    %c0_5 = arith.constant 0 : index
    %6 = vector.load %arg4[%c0_4, %c0_5] : memref<1x256xf32, #tpu.memory_space<vmem>>, vector<1x256xf32>
    %7 = vector.broadcast %6 : vector<1x256xf32> to vector<16x256xf32>
    %8 = arith.addf %5, %7 : vector<16x256xf32>
    %cst_6 = arith.constant dense<0xFF800000> : vector<16xf32>
    %9 = vector.multi_reduction <maximumf>, %8, %cst_6 [1] : vector<16x256xf32> to vector<16xf32>
    %10 = vector.shape_cast %9 : vector<16xf32> to vector<16x1xf32>
    %c256_i32 = arith.constant 256 : i32
    %11 = arith.muli %arg1, %c256_i32 : i32
    %12 = tpu.assume_multiple %11, 128 : i32
    %13 = vector.broadcast %10 : vector<16x1xf32> to vector<16x256xf32>
    %14 = arith.subf %8, %13 : vector<16x256xf32>
    %15 = math.exp %14 : vector<16x256xf32>
    %c0_7 = arith.constant 0 : index
    %16 = arith.index_cast %12 : i32 to index
    %17 = vector.load %arg5[%c0_7, %16] : memref<16x1024xf32, #tpu.memory_space<vmem>>, vector<16x256xf32>
    tpu.vector_store %arg5[%c0_7, %16], %15 {strides = array<i32>} : memref<16x1024xf32, #tpu.memory_space<vmem>>, vector<16x256xf32>,
    %18 = tpu.iota {dimensions = array<i32: 1>} : vector<16x4xi32>
    %19 = vector.broadcast %arg1 : i32 to vector<16x4xi32>
    %20 = arith.cmpi eq, %18, %19 : vector<16x4xi32>
    %c0_8 = arith.constant 0 : index
    %c0_9 = arith.constant 0 : index
    %21 = vector.load %arg6[%c0_8, %c0_9] : memref<16x4xf32, #tpu.memory_space<vmem>>, vector<16x4xf32>
    %22 = vector.shape_cast %10 : vector<16x1xf32> to vector<16x1xf32>
    %23 = vector.broadcast %22 : vector<16x1xf32> to vector<16x4xf32>
    %24 = arith.select %20, %23, %21 : vector<16x4xi1>, vector<16x4xf32>
    %c0_10 = arith.constant 0 : index
    %c0_11 = arith.constant 0 : index
    %25 = vector.load %arg6[%c0_10, %c0_11] : memref<16x4xf32, #tpu.memory_space<vmem>>, vector<16x4xf32>
    tpu.vector_store %arg6[%c0_10, %c0_11], %24 {strides = array<i32>} : memref<16x4xf32, #tpu.memory_space<vmem>>, vector<16x4xf32>,
    %c3_i32 = arith.constant 3 : i32
    %26 = arith.cmpi eq, %arg1, %c3_i32 : i32
    %27 = arith.extui %26 : i1 to i32
    %c0_i32_12 = arith.constant 0 : i32
    %28 = arith.cmpi ne, %27, %c0_i32_12 : i32
    scf.if %28 {
      %c0_13 = arith.constant 0 : index
      %c0_14 = arith.constant 0 : index
      %29 = vector.load %arg6[%c0_13, %c0_14] : memref<16x4xf32, #tpu.memory_space<vmem>>, vector<16x4xf32>
      %cst_15 = arith.constant dense<0xFF800000> : vector<16xf32>
      %30 = vector.multi_reduction <maximumf>, %29, %cst_15 [1] : vector<16x4xf32> to vector<16xf32>
      %31 = vector.shape_cast %30 : vector<16xf32> to vector<16x1xf32>
      %32 = vector.broadcast %31 : vector<16x1xf32> to vector<16x4xf32>
      %33 = arith.subf %29, %32 : vector<16x4xf32>
      %34 = math.exp %33 : vector<16x4xf32>
      %cst_16 = arith.constant 0.000000e+00 : f32
      %35 = vector.broadcast %cst_16 : f32 to vector<16x1xf32>
      %c0_17 = arith.constant 0 : index
      %c0_18 = arith.constant 0 : index
      %36 = vector.load %arg5[%c0_17, %c0_18] : memref<16x1024xf32, #tpu.memory_space<vmem>>, vector<16x256xf32>
      %37 = vector.extract_strided_slice %34 {offsets = [0, 0], sizes = [16, 1], strides = [1, 1]} : vector<16x4xf32> to vector<16x1xf32>
      %cst_19 = arith.constant dense<0.000000e+00> : vector<16xf32>
      %38 = vector.multi_reduction <add>, %36, %cst_19 [1] : vector<16x256xf32> to vector<16xf32>
      %39 = vector.shape_cast %38 : vector<16xf32> to vector<16x1xf32>
      %40 = arith.mulf %37, %39 : vector<16x1xf32>
      %41 = arith.addf %35, %40 : vector<16x1xf32>
      %c0_20 = arith.constant 0 : index
      %c256 = arith.constant 256 : index
      %42 = vector.load %arg5[%c0_20, %c256] : memref<16x1024xf32, #tpu.memory_space<vmem>>, vector<16x256xf32>
      %43 = vector.extract_strided_slice %34 {offsets = [0, 1], sizes = [16, 1], strides = [1, 1]} : vector<16x4xf32> to vector<16x1xf32>
      %cst_21 = arith.constant dense<0.000000e+00> : vector<16xf32>
      %44 = vector.multi_reduction <add>, %42, %cst_21 [1] : vector<16x256xf32> to vector<16xf32>
      %45 = vector.shape_cast %44 : vector<16xf32> to vector<16x1xf32>
      %46 = arith.mulf %43, %45 : vector<16x1xf32>
      %47 = arith.addf %41, %46 : vector<16x1xf32>
      %c0_22 = arith.constant 0 : index
      %c512 = arith.constant 512 : index
      %48 = vector.load %arg5[%c0_22, %c512] : memref<16x1024xf32, #tpu.memory_space<vmem>>, vector<16x256xf32>
      %49 = vector.extract_strided_slice %34 {offsets = [0, 2], sizes = [16, 1], strides = [1, 1]} : vector<16x4xf32> to vector<16x1xf32>
      %cst_23 = arith.constant dense<0.000000e+00> : vector<16xf32>
      %50 = vector.multi_reduction <add>, %48, %cst_23 [1] : vector<16x256xf32> to vector<16xf32>
      %51 = vector.shape_cast %50 : vector<16xf32> to vector<16x1xf32>
      %52 = arith.mulf %49, %51 : vector<16x1xf32>
      %53 = arith.addf %47, %52 : vector<16x1xf32>
      %c0_24 = arith.constant 0 : index
      %c768 = arith.constant 768 : index
      %54 = vector.load %arg5[%c0_24, %c768] : memref<16x1024xf32, #tpu.memory_space<vmem>>, vector<16x256xf32>
      %55 = vector.extract_strided_slice %34 {offsets = [0, 3], sizes = [16, 1], strides = [1, 1]} : vector<16x4xf32> to vector<16x1xf32>
      %cst_25 = arith.constant dense<0.000000e+00> : vector<16xf32>
      %56 = vector.multi_reduction <add>, %54, %cst_25 [1] : vector<16x256xf32> to vector<16xf32>
      %57 = vector.shape_cast %56 : vector<16xf32> to vector<16x1xf32>
      %58 = arith.mulf %55, %57 : vector<16x1xf32>
      %59 = arith.addf %53, %58 : vector<16x1xf32>
      %cst_26 = arith.constant 1.000000e+00 : f32
      %60 = vector.broadcast %cst_26 : f32 to vector<16x1xf32>
      %61 = arith.divf %60, %59 : vector<16x1xf32>
      %62 = vector.extract_strided_slice %34 {offsets = [0, 0], sizes = [16, 1], strides = [1, 1]} : vector<16x4xf32> to vector<16x1xf32>
      %63 = arith.mulf %62, %61 : vector<16x1xf32>
      %c0_27 = arith.constant 0 : index
      %c0_28 = arith.constant 0 : index
      %64 = vector.load %arg5[%c0_27, %c0_28] : memref<16x1024xf32, #tpu.memory_space<vmem>>, vector<16x256xf32>
      %65 = vector.broadcast %63 : vector<16x1xf32> to vector<16x256xf32>
      %66 = arith.mulf %64, %65 : vector<16x256xf32>
      %c0_29 = arith.constant 0 : index
      %c0_30 = arith.constant 0 : index
      %67 = vector.load %arg5[%c0_29, %c0_30] : memref<16x1024xf32, #tpu.memory_space<vmem>>, vector<16x256xf32>
      tpu.vector_store %arg5[%c0_29, %c0_30], %66 {strides = array<i32>} : memref<16x1024xf32, #tpu.memory_space<vmem>>, vector<16x256xf32>,
      %68 = vector.extract_strided_slice %34 {offsets = [0, 1], sizes = [16, 1], strides = [1, 1]} : vector<16x4xf32> to vector<16x1xf32>
      %69 = arith.mulf %68, %61 : vector<16x1xf32>
      %c0_31 = arith.constant 0 : index
      %c256_32 = arith.constant 256 : index
      %70 = vector.load %arg5[%c0_31, %c256_32] : memref<16x1024xf32, #tpu.memory_space<vmem>>, vector<16x256xf32>
      %71 = vector.broadcast %69 : vector<16x1xf32> to vector<16x256xf32>
      %72 = arith.mulf %70, %71 : vector<16x256xf32>
      %c0_33 = arith.constant 0 : index
      %c256_34 = arith.constant 256 : index
      %73 = vector.load %arg5[%c0_33, %c256_34] : memref<16x1024xf32, #tpu.memory_space<vmem>>, vector<16x256xf32>
      tpu.vector_store %arg5[%c0_33, %c256_34], %72 {strides = array<i32>} : memref<16x1024xf32, #tpu.memory_space<vmem>>, vector<16x256xf32>,
      %74 = vector.extract_strided_slice %34 {offsets = [0, 2], sizes = [16, 1], strides = [1, 1]} : vector<16x4xf32> to vector<16x1xf32>
      %75 = arith.mulf %74, %61 : vector<16x1xf32>
      %c0_35 = arith.constant 0 : index
      %c512_36 = arith.constant 512 : index
      %76 = vector.load %arg5[%c0_35, %c512_36] : memref<16x1024xf32, #tpu.memory_space<vmem>>, vector<16x256xf32>
      %77 = vector.broadcast %75 : vector<16x1xf32> to vector<16x256xf32>
      %78 = arith.mulf %76, %77 : vector<16x256xf32>
      %c0_37 = arith.constant 0 : index
      %c512_38 = arith.constant 512 : index
      %79 = vector.load %arg5[%c0_37, %c512_38] : memref<16x1024xf32, #tpu.memory_space<vmem>>, vector<16x256xf32>
      tpu.vector_store %arg5[%c0_37, %c512_38], %78 {strides = array<i32>} : memref<16x1024xf32, #tpu.memory_space<vmem>>, vector<16x256xf32>,
      %80 = vector.extract_strided_slice %34 {offsets = [0, 3], sizes = [16, 1], strides = [1, 1]} : vector<16x4xf32> to vector<16x1xf32>
      %81 = arith.mulf %80, %61 : vector<16x1xf32>
      %c0_39 = arith.constant 0 : index
      %c768_40 = arith.constant 768 : index
      %82 = vector.load %arg5[%c0_39, %c768_40] : memref<16x1024xf32, #tpu.memory_space<vmem>>, vector<16x256xf32>
      %83 = vector.broadcast %81 : vector<16x1xf32> to vector<16x256xf32>
      %84 = arith.mulf %82, %83 : vector<16x256xf32>
      %c0_41 = arith.constant 0 : index
      %c768_42 = arith.constant 768 : index
      %85 = vector.load %arg5[%c0_41, %c768_42] : memref<16x1024xf32, #tpu.memory_space<vmem>>, vector<16x256xf32>
      tpu.vector_store %arg5[%c0_41, %c768_42], %84 {strides = array<i32>} : memref<16x1024xf32, #tpu.memory_space<vmem>>, vector<16x256xf32>,
    } else {
    }
    return
  }
  func.func @transform_0(%arg0: i32, %arg1: i32) -> (i32, i32) {
    %c0_i32 = arith.constant 0 : i32
    %c0_i32_0 = arith.constant 0 : i32
    return %arg0, %c0_i32 : i32, i32
  }
  func.func @transform_1(%arg0: i32, %arg1: i32) -> (i32, i32) {
    %c0_i32 = arith.constant 0 : i32
    %c0_i32_0 = arith.constant 0 : i32
    return %c0_i32, %arg1 : i32, i32
  }
  func.func @transform_2(%arg0: i32, %arg1: i32) -> (i32, i32) {
    %c0_i32 = arith.constant 0 : i32
    %c0_i32_0 = arith.constant 0 : i32
    return %c0_i32, %arg1 : i32, i32
  }
  func.func @transform_3(%arg0: i32, %arg1: i32) -> (i32, i32) {
    %c0_i32 = arith.constant 0 : i32
    %c0_i32_0 = arith.constant 0 : i32
    return %arg0, %c0_i32 : i32, i32
  }
}

module attributes {stable_mosaic.version = 11 : i64} {
  func.func @kernel(%arg0: i32, %arg1: i32, %arg2: memref<16x256xbf16, #tpu.memory_space<vmem>>, %arg3: memref<256x256xbf16, #tpu.memory_space<vmem>>, %arg4: memref<1x256xf32, #tpu.memory_space<vmem>>, %arg5: memref<16x1024xf32, #tpu.memory_space<vmem>>, %arg6: memref<16x4xf32, #tpu.memory_space<vmem>>) attributes {dimension_semantics = [#tpu.dimension_semantics<parallel>, #tpu.dimension_semantics<arbitrary>], iteration_bounds = array<i64: 2, 4>, scalar_prefetch = 0 : i64, scratch_operands = 1 : i64, tpu.core_type = #tpu.core_type<tc>, window_params = [{transform_indices = @transform_0, window_bounds = array<i64: 16, 256>}, {transform_indices = @transform_1, window_bounds = array<i64: 256, 256>}, {transform_indices = @transform_2, window_bounds = array<i64: 1, 256>}, {transform_indices = @transform_3, window_bounds = array<i64: 16, 1024>}]} {
    %c0_i32 = arith.constant 0 : i32
    %0 = arith.cmpi eq, %arg1, %c0_i32 : i32
    %1 = arith.extui %0 : i1 to i32
    %c0_i32_0 = arith.constant 0 : i32
    %2 = arith.cmpi ne, %1, %c0_i32_0 : i32
    scf.if %2 {
      %cst_13 = arith.constant 0xFF800000 : f32
      %29 = vector.broadcast %cst_13 : f32 to vector<16x4xf32>
      %c0_14 = arith.constant 0 : index
      %c0_15 = arith.constant 0 : index
      %30 = vector.load %arg6[%c0_14, %c0_15] : memref<16x4xf32, #tpu.memory_space<vmem>>, vector<16x4xf32>
      tpu.vector_store %arg6[%c0_14, %c0_15], %29 {strides = array<i32>} : memref<16x4xf32, #tpu.memory_space<vmem>>, vector<16x4xf32>,
    } else {
    }
    %c0 = arith.constant 0 : index
    %c0_1 = arith.constant 0 : index
    %3 = vector.load %arg2[%c0, %c0_1] : memref<16x256xbf16, #tpu.memory_space<vmem>>, vector<16x256xbf16>
    %c0_2 = arith.constant 0 : index
    %c0_3 = arith.constant 0 : index
    %4 = vector.load %arg3[%c0_2, %c0_3] : memref<256x256xbf16, #tpu.memory_space<vmem>>, vector<256x256xbf16>
    %cst = arith.constant dense<0.000000e+00> : vector<16x256xf32>
    %5 = tpu.matmul %3, %4, %cst {dimension_numbers = #tpu.dot_dimension_numbers<[1], [0], [0], [1], [0, 0, 1, 1], [], []>} : vector<16x256xbf16>, vector<256x256xbf16>, vector<16x256xf32> -> vector<16x256xf32>
    %c0_4 = arith.constant 0 : index
    %c0_5 = arith.constant 0 : index
    %6 = vector.load %arg4[%c0_4, %c0_5] : memref<1x256xf32, #tpu.memory_space<vmem>>, vector<1x256xf32>
    %7 = vector.broadcast %6 : vector<1x256xf32> to vector<16x256xf32>
    %8 = arith.addf %5, %7 : vector<16x256xf32>
    %cst_6 = arith.constant dense<0xFF800000> : vector<16xf32>
    %9 = vector.multi_reduction <maximumf>, %8, %cst_6 [1] : vector<16x256xf32> to vector<16xf32>
    %10 = vector.shape_cast %9 : vector<16xf32> to vector<16x1xf32>
    %c256_i32 = arith.constant 256 : i32
    %11 = arith.muli %arg1, %c256_i32 : i32
    %12 = tpu.assume_multiple %11, 128 : i32
    %13 = vector.broadcast %10 : vector<16x1xf32> to vector<16x256xf32>
    %14 = arith.subf %8, %13 : vector<16x256xf32>
    %15 = math.exp %14 : vector<16x256xf32>
    %c0_7 = arith.constant 0 : index
    %16 = arith.index_cast %12 : i32 to index
    %17 = vector.load %arg5[%c0_7, %16] : memref<16x1024xf32, #tpu.memory_space<vmem>>, vector<16x256xf32>
    tpu.vector_store %arg5[%c0_7, %16], %15 {strides = array<i32>} : memref<16x1024xf32, #tpu.memory_space<vmem>>, vector<16x256xf32>,
    %18 = tpu.iota {dimensions = array<i32: 1>} : vector<16x4xi32>
    %19 = vector.broadcast %arg1 : i32 to vector<16x4xi32>
    %20 = arith.cmpi eq, %18, %19 : vector<16x4xi32>
    %c0_8 = arith.constant 0 : index
    %c0_9 = arith.constant 0 : index
    %21 = vector.load %arg6[%c0_8, %c0_9] : memref<16x4xf32, #tpu.memory_space<vmem>>, vector<16x4xf32>
    %22 = vector.shape_cast %10 : vector<16x1xf32> to vector<16x1xf32>
    %23 = vector.broadcast %22 : vector<16x1xf32> to vector<16x4xf32>
    %24 = arith.select %20, %23, %21 : vector<16x4xi1>, vector<16x4xf32>
    %c0_10 = arith.constant 0 : index
    %c0_11 = arith.constant 0 : index
    %25 = vector.load %arg6[%c0_10, %c0_11] : memref<16x4xf32, #tpu.memory_space<vmem>>, vector<16x4xf32>
    tpu.vector_store %arg6[%c0_10, %c0_11], %24 {strides = array<i32>} : memref<16x4xf32, #tpu.memory_space<vmem>>, vector<16x4xf32>,
    %c3_i32 = arith.constant 3 : i32
    %26 = arith.cmpi eq, %arg1, %c3_i32 : i32
    %27 = arith.extui %26 : i1 to i32
    %c0_i32_12 = arith.constant 0 : i32
    %28 = arith.cmpi ne, %27, %c0_i32_12 : i32
    scf.if %28 {
      %c0_13 = arith.constant 0 : index
      %c0_14 = arith.constant 0 : index
      %29 = vector.load %arg6[%c0_13, %c0_14] : memref<16x4xf32, #tpu.memory_space<vmem>>, vector<16x4xf32>
      %cst_15 = arith.constant dense<0xFF800000> : vector<16xf32>
      %30 = vector.multi_reduction <maximumf>, %29, %cst_15 [1] : vector<16x4xf32> to vector<16xf32>
      %31 = vector.shape_cast %30 : vector<16xf32> to vector<16x1xf32>
      %32 = vector.broadcast %31 : vector<16x1xf32> to vector<16x4xf32>
      %33 = arith.subf %29, %32 : vector<16x4xf32>
      %34 = math.exp %33 : vector<16x4xf32>
      %cst_16 = arith.constant 0.000000e+00 : f32
      %35 = vector.broadcast %cst_16 : f32 to vector<16x1xf32>
      %c0_17 = arith.constant 0 : index
      %c0_18 = arith.constant 0 : index
      %36 = vector.load %arg5[%c0_17, %c0_18] : memref<16x1024xf32, #tpu.memory_space<vmem>>, vector<16x256xf32>
      %37 = vector.extract_strided_slice %34 {offsets = [0, 0], sizes = [16, 1], strides = [1, 1]} : vector<16x4xf32> to vector<16x1xf32>
      %cst_19 = arith.constant dense<0.000000e+00> : vector<16xf32>
      %38 = vector.multi_reduction <add>, %36, %cst_19 [1] : vector<16x256xf32> to vector<16xf32>
      %39 = vector.shape_cast %38 : vector<16xf32> to vector<16x1xf32>
      %40 = arith.mulf %37, %39 : vector<16x1xf32>
      %41 = arith.addf %35, %40 : vector<16x1xf32>
      %c0_20 = arith.constant 0 : index
      %c256 = arith.constant 256 : index
      %42 = vector.load %arg5[%c0_20, %c256] : memref<16x1024xf32, #tpu.memory_space<vmem>>, vector<16x256xf32>
      %43 = vector.extract_strided_slice %34 {offsets = [0, 1], sizes = [16, 1], strides = [1, 1]} : vector<16x4xf32> to vector<16x1xf32>
      %cst_21 = arith.constant dense<0.000000e+00> : vector<16xf32>
      %44 = vector.multi_reduction <add>, %42, %cst_21 [1] : vector<16x256xf32> to vector<16xf32>
      %45 = vector.shape_cast %44 : vector<16xf32> to vector<16x1xf32>
      %46 = arith.mulf %43, %45 : vector<16x1xf32>
      %47 = arith.addf %41, %46 : vector<16x1xf32>
      %c0_22 = arith.constant 0 : index
      %c512 = arith.constant 512 : index
      %48 = vector.load %arg5[%c0_22, %c512] : memref<16x1024xf32, #tpu.memory_space<vmem>>, vector<16x256xf32>
      %49 = vector.extract_strided_slice %34 {offsets = [0, 2], sizes = [16, 1], strides = [1, 1]} : vector<16x4xf32> to vector<16x1xf32>
      %cst_23 = arith.constant dense<0.000000e+00> : vector<16xf32>
      %50 = vector.multi_reduction <add>, %48, %cst_23 [1] : vector<16x256xf32> to vector<16xf32>
      %51 = vector.shape_cast %50 : vector<16xf32> to vector<16x1xf32>
      %52 = arith.mulf %49, %51 : vector<16x1xf32>
      %53 = arith.addf %47, %52 : vector<16x1xf32>
      %c0_24 = arith.constant 0 : index
      %c768 = arith.constant 768 : index
      %54 = vector.load %arg5[%c0_24, %c768] : memref<16x1024xf32, #tpu.memory_space<vmem>>, vector<16x256xf32>
      %55 = vector.extract_strided_slice %34 {offsets = [0, 3], sizes = [16, 1], strides = [1, 1]} : vector<16x4xf32> to vector<16x1xf32>
      %cst_25 = arith.constant dense<0.000000e+00> : vector<16xf32>
      %56 = vector.multi_reduction <add>, %54, %cst_25 [1] : vector<16x256xf32> to vector<16xf32>
      %57 = vector.shape_cast %56 : vector<16xf32> to vector<16x1xf32>
      %58 = arith.mulf %55, %57 : vector<16x1xf32>
      %59 = arith.addf %53, %58 : vector<16x1xf32>
      %cst_26 = arith.constant 1.000000e+00 : f32
      %60 = vector.broadcast %cst_26 : f32 to vector<16x1xf32>
      %61 = arith.divf %60, %59 : vector<16x1xf32>
      %62 = vector.extract_strided_slice %34 {offsets = [0, 0], sizes = [16, 1], strides = [1, 1]} : vector<16x4xf32> to vector<16x1xf32>
      %63 = arith.mulf %62, %61 : vector<16x1xf32>
      %c0_27 = arith.constant 0 : index
      %c0_28 = arith.constant 0 : index
      %64 = vector.load %arg5[%c0_27, %c0_28] : memref<16x1024xf32, #tpu.memory_space<vmem>>, vector<16x256xf32>
      %65 = vector.broadcast %63 : vector<16x1xf32> to vector<16x256xf32>
      %66 = arith.mulf %64, %65 : vector<16x256xf32>
      %c0_29 = arith.constant 0 : index
      %c0_30 = arith.constant 0 : index
      %67 = vector.load %arg5[%c0_29, %c0_30] : memref<16x1024xf32, #tpu.memory_space<vmem>>, vector<16x256xf32>
      tpu.vector_store %arg5[%c0_29, %c0_30], %66 {strides = array<i32>} : memref<16x1024xf32, #tpu.memory_space<vmem>>, vector<16x256xf32>,
      %68 = vector.extract_strided_slice %34 {offsets = [0, 1], sizes = [16, 1], strides = [1, 1]} : vector<16x4xf32> to vector<16x1xf32>
      %69 = arith.mulf %68, %61 : vector<16x1xf32>
      %c0_31 = arith.constant 0 : index
      %c256_32 = arith.constant 256 : index
      %70 = vector.load %arg5[%c0_31, %c256_32] : memref<16x1024xf32, #tpu.memory_space<vmem>>, vector<16x256xf32>
      %71 = vector.broadcast %69 : vector<16x1xf32> to vector<16x256xf32>
      %72 = arith.mulf %70, %71 : vector<16x256xf32>
      %c0_33 = arith.constant 0 : index
      %c256_34 = arith.constant 256 : index
      %73 = vector.load %arg5[%c0_33, %c256_34] : memref<16x1024xf32, #tpu.memory_space<vmem>>, vector<16x256xf32>
      tpu.vector_store %arg5[%c0_33, %c256_34], %72 {strides = array<i32>} : memref<16x1024xf32, #tpu.memory_space<vmem>>, vector<16x256xf32>,
      %74 = vector.extract_strided_slice %34 {offsets = [0, 2], sizes = [16, 1], strides = [1, 1]} : vector<16x4xf32> to vector<16x1xf32>
      %75 = arith.mulf %74, %61 : vector<16x1xf32>
      %c0_35 = arith.constant 0 : index
      %c512_36 = arith.constant 512 : index
      %76 = vector.load %arg5[%c0_35, %c512_36] : memref<16x1024xf32, #tpu.memory_space<vmem>>, vector<16x256xf32>
      %77 = vector.broadcast %75 : vector<16x1xf32> to vector<16x256xf32>
      %78 = arith.mulf %76, %77 : vector<16x256xf32>
      %c0_37 = arith.constant 0 : index
      %c512_38 = arith.constant 512 : index
      %79 = vector.load %arg5[%c0_37, %c512_38] : memref<16x1024xf32, #tpu.memory_space<vmem>>, vector<16x256xf32>
      tpu.vector_store %arg5[%c0_37, %c512_38], %78 {strides = array<i32>} : memref<16x1024xf32, #tpu.memory_space<vmem>>, vector<16x256xf32>,
      %80 = vector.extract_strided_slice %34 {offsets = [0, 3], sizes = [16, 1], strides = [1, 1]} : vector<16x4xf32> to vector<16x1xf32>
      %81 = arith.mulf %80, %61 : vector<16x1xf32>
      %c0_39 = arith.constant 0 : index
      %c768_40 = arith.constant 768 : index
      %82 = vector.load %arg5[%c0_39, %c768_40] : memref<16x1024xf32, #tpu.memory_space<vmem>>, vector<16x256xf32>
      %83 = vector.broadcast %81 : vector<16x1xf32> to vector<16x256xf32>
      %84 = arith.mulf %82, %83 : vector<16x256xf32>
      %c0_41 = arith.constant 0 : index
      %c768_42 = arith.constant 768 : index
      %85 = vector.load %arg5[%c0_41, %c768_42] : memref<16x1024xf32, #tpu.memory_space<vmem>>, vector<16x256xf32>
      tpu.vector_store %arg5[%c0_41, %c768_42], %84 {strides = array<i32>} : memref<16x1024xf32, #tpu.memory_space<vmem>>, vector<16x256xf32>,
    } else {
    }
    return
  }
  func.func @transform_0(%arg0: i32, %arg1: i32) -> (i32, i32) {
    %c0_i32 = arith.constant 0 : i32
    %c0_i32_0 = arith.constant 0 : i32
    return %arg0, %c0_i32 : i32, i32
  }
  func.func @transform_1(%arg0: i32, %arg1: i32) -> (i32, i32) {
    %c0_i32 = arith.constant 0 : i32
    %c0_i32_0 = arith.constant 0 : i32
    return %c0_i32, %arg1 : i32, i32
  }
  func.func @transform_2(%arg0: i32, %arg1: i32) -> (i32, i32) {
    %c0_i32 = arith.constant 0 : i32
    %c0_i32_0 = arith.constant 0 : i32
    return %c0_i32, %arg1 : i32, i32
  }
  func.func @transform_3(%arg0: i32, %arg1: i32) -> (i32, i32) {
    %c0_i32 = arith.constant 0 : i32
    %c0_i32_0 = arith.constant 0 : i32
    return %arg0, %c0_i32 : i32, i32
  }
}

</mosaic_0001>

<llo_original>
// kernel: tpu_custom_call.1
$region0: #{tpu_custom_call.1}
  #allocation0 [shape = 'u32[]', space=smem, size = 0x4, offset = 0x4, fixed_abs, tag = 'smem constant byte address 0x4 - core index']
  #allocation1 [shape = 'u32[144,128]{1,0:T(1,128)}', space=vmem, size = 0x12000, scoped, tag = 'internal scratch']
  #allocation2 [shape = 'f32[16,4]{1,0:T(8,128)}', space=vmem, size = 0x2000, scoped, tag = 'scratch operand']
  %s0 = inlined_call_operand.hbm [shape: bf16[32,256], index: 0, kind: input, shape index: {}]
  %s1 = inlined_call_operand.hbm [shape: bf16[256,1024], index: 1, kind: input, shape index: {}]
  %s2 = inlined_call_operand.hbm [shape: f32[1,1024], index: 2, kind: input, shape index: {}]
  %s3 = inlined_call_operand.hbm [shape: f32[32,1024], index: 3, kind: output, shape index: {}]
  %s4 = sld [smem:[#allocation0]]
  $region65: #{tpu_custom_call.1} parent=0
    _
  %s6 = ssub.s32 1, %s4
  %s7 = scalar_select 0, %s6, %s4
  $region1: #{tpu_custom_call.1} parent=0
    #allocation3 [shape = 'u8[16384]{0}', space=vmem, size = 0x4000, scoped, tag = 'input window, operand 0']
    #allocation4 [shape = 's32[2]{0}', space=sflag, size = 0x8, scoped, tag = 'scoped memory for tpu_custom_call.1']
    #allocation5 [shape = 's32[2]{0}', space=sflag, size = 0x8, scoped, tag = 'scoped memory for tpu_custom_call.1']
    #allocation6 [shape = 'u8[262144]{0}', space=vmem, size = 0x40000, scoped, tag = 'input window, operand 1']
    #allocation7 [shape = 's32[2]{0}', space=sflag, size = 0x8, scoped, tag = 'scoped memory for tpu_custom_call.1']
    #allocation8 [shape = 'u8[2048]{0}', space=vmem, size = 0x800, scoped, tag = 'input window, operand 2']
    #allocation9 [shape = 'u8[65536]{0}', space=vmem, size = 0x10000, scoped, tag = 'output window, operand 0, single buffered']
    %8 = vsyncpa [#allocation4], 0
    %s9 = scalar_lea.sflag [#allocation4], 1
    %10 = vsyncpa %s9, 0
    %11 = vsyncpa [#allocation7], 0
    %s12 = scalar_lea.sflag [#allocation7], 1
    %13 = vsyncpa %s12, 0
    %14 = vsyncpa [#allocation5], 0
    loop: start=0, step=1, limit=10
    $region2: #{tpu_custom_call.1} parent=1 // loop_pre_header
      _
    $region3: #{tpu_custom_call.1} parent=1 // loop_header
      %s16 = sphi 0, %s20
      %p17 = scmp.ge.s32.totalorder %s16, 10
      %s23 = sphi 0, %s35
      %s24 = sphi 0, %s31
      %s25 = sphi 0, %s23
      %s26 = sphi 0, %s24
      %s27 = sphi 0, %s25
      %s28 = sphi 0, %s26
      %s38 = sphi 0, %s40
      %s41 = sphi 0, %s38
      %s42 = sphi 0, %s41
      %s58 = sphi 0, %s42
      %s64 = sphi 0, %s66
      %s67 = sphi 0, %s64
      %s68 = sphi 0, %s67
      %s84 = sphi 0, %s68
      %s90 = sphi 0, %s92
      %s93 = sphi 0, %s90
      %s94 = sphi 0, %s93
      %s110 = sphi 0, %s94
      %s116 = sphi 0, %s118
      %s119 = sphi 0, %s116
      %s120 = sphi 0, %s119
      %s136 = sphi 0, %s120
    $region4: #{tpu_custom_call.1} parent=1 // loop_header_branch
      %19 = sbr.rel (%p17) target = $region8
    $region5: #{tpu_custom_call.1} parent=1 // loop_body
      %s21 = ssub.s32 %s16, 1
      %s22 = ssub.s32 %s16, 2
      %s29 = sadd.s32 1, %s24
      %p30 = scmp.ge.s32.totalorder %s29, 4
      %s31 = scalar_select %p30, 0, %s29
      %s32 = sadd.s32 1, %s23
      %s33 = scalar_select %p30, %s32, %s23
      %p34 = scmp.ge.s32.totalorder %s33, 2
      %s35 = scalar_select %p34, 0, %s33
      %s36 = ssub.s32 %s23, %s35
      %p37 = scmp.eq.s32.totalorder %s36, 0
      %s39 = sadd.s32 %s38, 1
      %s40 = scalar_select %p37, %s38, %s39
      %p43 = pneg %p37
      %p44 = scmp.eq.s32.totalorder %s16, 7
      %p45 = por %p43, %p44
      %p46 = scmp.ne.s32.totalorder %s38, %s41
      %p47 = scmp.eq.s32.totalorder %s16, 0
      %p48 = por %p46, %p47
      %p49 = scmp.ne.s32.totalorder %s38, %s41
      %p50 = scmp.eq.s32.totalorder %s21, 7
      %p51 = por %p49, %p50
      %p52 = scmp.ne.s32.totalorder %s41, %s42
      %p53 = scmp.eq.s32.totalorder %s21, 0
      %p54 = por %p52, %p53
      %p55 = scmp.ne.s32.totalorder %s41, %s42
      %p56 = scmp.eq.s32.totalorder %s22, 7
      %p57 = por %p55, %p56
      %p59 = scmp.ne.s32.totalorder %s42, %s58
      %p60 = scmp.eq.s32.totalorder %s22, 0
      %p61 = por %p59, %p60
      %s62 = ssub.s32 %s24, %s31
      %p63 = scmp.eq.s32.totalorder %s62, 0
      %s65 = sadd.s32 %s64, 1
      %s66 = scalar_select %p63, %s64, %s65
      %p69 = pneg %p63
      %p70 = scmp.eq.s32.totalorder %s16, 7
      %p71 = por %p69, %p70
      %p72 = scmp.ne.s32.totalorder %s64, %s67
      %p73 = scmp.eq.s32.totalorder %s16, 0
      %p74 = por %p72, %p73
      %p75 = scmp.ne.s32.totalorder %s64, %s67
      %p76 = scmp.eq.s32.totalorder %s21, 7
      %p77 = por %p75, %p76
      %p78 = scmp.ne.s32.totalorder %s67, %s68
      %p79 = scmp.eq.s32.totalorder %s21, 0
      %p80 = por %p78, %p79
      %p81 = scmp.ne.s32.totalorder %s67, %s68
      %p82 = scmp.eq.s32.totalorder %s22, 7
      %p83 = por %p81, %p82
      %p85 = scmp.ne.s32.totalorder %s68, %s84
      %p86 = scmp.eq.s32.totalorder %s22, 0
      %p87 = por %p85, %p86
      %s88 = ssub.s32 %s24, %s31
      %p89 = scmp.eq.s32.totalorder %s88, 0
      %s91 = sadd.s32 %s90, 1
      %s92 = scalar_select %p89, %s90, %s91
      %p95 = pneg %p89
      %p96 = scmp.eq.s32.totalorder %s16, 7
      %p97 = por %p95, %p96
      %p98 = scmp.ne.s32.totalorder %s90, %s93
      %p99 = scmp.eq.s32.totalorder %s16, 0
      %p100 = por %p98, %p99
      %p101 = scmp.ne.s32.totalorder %s90, %s93
      %p102 = scmp.eq.s32.totalorder %s21, 7
      %p103 = por %p101, %p102
      %p104 = scmp.ne.s32.totalorder %s93, %s94
      %p105 = scmp.eq.s32.totalorder %s21, 0
      %p106 = por %p104, %p105
      %p107 = scmp.ne.s32.totalorder %s93, %s94
      %p108 = scmp.eq.s32.totalorder %s22, 7
      %p109 = por %p107, %p108
      %p111 = scmp.ne.s32.totalorder %s94, %s110
      %p112 = scmp.eq.s32.totalorder %s22, 0
      %p113 = por %p111, %p112
      %s114 = ssub.s32 %s23, %s35
      %p115 = scmp.eq.s32.totalorder %s114, 0
      %s117 = sadd.s32 %s116, 1
      %s118 = scalar_select %p115, %s116, %s117
      %p121 = pneg %p115
      %p122 = scmp.eq.s32.totalorder %s16, 7
      %p123 = por %p121, %p122
      %p124 = scmp.ne.s32.totalorder %s116, %s119
      %p125 = scmp.eq.s32.totalorder %s16, 0
      %p126 = por %p124, %p125
      %p127 = scmp.ne.s32.totalorder %s116, %s119
      %p128 = scmp.eq.s32.totalorder %s21, 7
      %p129 = por %p127, %p128
      %p130 = scmp.ne.s32.totalorder %s119, %s120
      %p131 = scmp.eq.s32.totalorder %s21, 0
      %p132 = por %p130, %p131
      %p133 = scmp.ne.s32.totalorder %s119, %s120
      %p134 = scmp.eq.s32.totalorder %s22, 7
      %p135 = por %p133, %p134
      %p137 = scmp.ne.s32.totalorder %s120, %s136
      %p138 = scmp.eq.s32.totalorder %s22, 0
      %p139 = por %p137, %p138
      %p140 = scmp.le.s32.totalorder 1, %s16
      %p141 = scmp.lt.s32.totalorder %s16, 9
      %p142 = pnand %p140, %p141
      %p143 = pneg %p142
      // Predicated region
      $region9: #{tpu_custom_call.1} parent=5 // pred_check
        _
      $region10: #{tpu_custom_call.1} parent=5 // pred_check_branch
        %145 = sbr.rel (%p142) target = $region12
      $region11: #{tpu_custom_call.1} parent=5 // pred_region
        %s146 = ssub.s32 %s16, 1
      $region12: #{tpu_custom_call.1} parent=5 // pred_fallthru
        _
      %p147 = scmp.lt.s32.totalorder %s16, 8
      // Predicated region
      $region13: #{tpu_custom_call.1} parent=5 // pred_check
        %p148 = pneg %p147
      $region14: #{tpu_custom_call.1} parent=5 // pred_check_branch
        %150 = sbr.rel (%p148) target = $region16
      $region15: #{tpu_custom_call.1} parent=5 // pred_region
        // Predicated region
        $region17: #{tpu_custom_call.1} parent=15 // pred_check
          %p151 = pneg %p48
        $region18: #{tpu_custom_call.1} parent=15 // pred_check_branch
          %153 = sbr.rel (%p151) target = $region20
        $region19: #{tpu_custom_call.1} parent=15 // pred_region
          %s154 = sand.u32 %s38, 1
          %s155 = scalar_lea.sflag [#allocation4], %s154
          %s156 = sand.u32 %s38, 1
          %s157 = smul.addr %s156, 16
          %s158 = scalar_lea.vmem [#allocation3], %s157
          %s159 = smul.u32 2, %s23
          %s161 = ssub.s32 256, 256
          %162 = vsyncadd %s155, %s161
          %s163 = smul.addr %s159, 2
          %s164 = smul.addr %s163, 64
          %s165 = scalar_lea.hbm %s0, %s164
          %s166 = sshll.u32 %s158, 4
          %s167 = int_to_ptr.vmem [resolvable:$true] %s166
          %172 = dma.hbm_to_vmem [thread:$0]  %s165, 256, %s167, %s155, 128, 128, 8
        $region20: #{tpu_custom_call.1} parent=15 // pred_fallthru
          _
        // Predicated region
        $region21: #{tpu_custom_call.1} parent=15 // pred_check
          %p173 = pneg %p74
        $region22: #{tpu_custom_call.1} parent=15 // pred_check_branch
          %175 = sbr.rel (%p173) target = $region24
        $region23: #{tpu_custom_call.1} parent=15 // pred_region
          %s176 = sand.u32 %s16, 1
          %s177 = scalar_lea.sflag [#allocation7], %s176
          %s178 = sand.u32 %s64, 1
          %s179 = smul.addr %s178, 256
          %s180 = scalar_lea.vmem [#allocation6], %s179
          %s181 = smul.u32 2, %s24
          %s183 = ssub.s32 4096, 4096
          %184 = vsyncadd %s177, %s183
          %s185 = smul.addr %s181, 64
          %s186 = scalar_lea.hbm %s1, %s185
          %s187 = sshll.u32 %s180, 4
          %s188 = int_to_ptr.vmem [resolvable:$true] %s187
          %193 = dma.hbm_to_vmem [thread:$0]  %s186, 4096, %s188, %s177, 512, 128, 8
        $region24: #{tpu_custom_call.1} parent=15 // pred_fallthru
          _
        // Predicated region
        $region25: #{tpu_custom_call.1} parent=15 // pred_check
          %p194 = pneg %p100
        $region26: #{tpu_custom_call.1} parent=15 // pred_check_branch
          %196 = sbr.rel (%p194) target = $region28
        $region27: #{tpu_custom_call.1} parent=15 // pred_region
          %s197 = sand.u32 %s16, 1
          %s198 = scalar_lea.sflag [#allocation7], %s197
          %s199 = sand.u32 %s90, 1
          %s200 = smul.addr %s199, 2
          %s201 = scalar_lea.vmem [#allocation8], %s200
          %s202 = smul.u32 2, %s24
          %s204 = ssub.s32 32, 32
          %205 = vsyncadd %s198, %s204
          %s206 = smul.addr %s202, 16
          %s207 = scalar_lea.hbm %s2, %s206
          %s209 = sshll.u32 %s201, 4
          %s210 = int_to_ptr.vmem [resolvable:$true] %s209
          %212 = dma.hbm_to_vmem [thread:$0]  %s207, 32, %s210, %s198
        $region28: #{tpu_custom_call.1} parent=15 // pred_fallthru
          _
      $region16: #{tpu_custom_call.1} parent=5 // pred_fallthru
        _
      %p213 = scmp.le.s32.totalorder 1, %s16
      %p214 = scmp.lt.s32.totalorder %s16, 9
      %p215 = pnand %p213, %p214
      %p216 = pneg %p215
      // Predicated region
      $region29: #{tpu_custom_call.1} parent=5 // pred_check
        _
      $region30: #{tpu_custom_call.1} parent=5 // pred_check_branch
        %218 = sbr.rel (%p215) target = $region32
      $region31: #{tpu_custom_call.1} parent=5 // pred_region
        %s219 = ssub.s32 %s16, 1
        %s220 = sand.u32 %s41, 1
        %s221 = scalar_lea.sflag [#allocation4], %s220
        %s222 = sand.u32 %s41, 1
        %s223 = smul.addr %s222, 16
        %s224 = scalar_lea.vmem [#allocation3], %s223
        // Predicated region
        $region33: #{tpu_custom_call.1} parent=31 // pred_check
          %p225 = pneg %p54
        $region34: #{tpu_custom_call.1} parent=31 // pred_check_branch
          %227 = sbr.rel (%p225) target = $region36
        $region35: #{tpu_custom_call.1} parent=31 // pred_region
          %228 = dma.done %s221, 256
        $region36: #{tpu_custom_call.1} parent=31 // pred_fallthru
          _
        %s229 = sand.u32 %s21, 1
        %s230 = scalar_lea.sflag [#allocation7], %s229
        %s231 = sand.u32 %s67, 1
        %s232 = smul.addr %s231, 256
        %s233 = scalar_lea.vmem [#allocation6], %s232
        // Predicated region
        $region37: #{tpu_custom_call.1} parent=31 // pred_check
          %p234 = pneg %p80
        $region38: #{tpu_custom_call.1} parent=31 // pred_check_branch
          %236 = sbr.rel (%p234) target = $region40
        $region39: #{tpu_custom_call.1} parent=31 // pred_region
          %237 = dma.done %s230, 4096
        $region40: #{tpu_custom_call.1} parent=31 // pred_fallthru
          _
        %s238 = sand.u32 %s21, 1
        %s239 = scalar_lea.sflag [#allocation7], %s238
        %s240 = sand.u32 %s93, 1
        %s241 = smul.addr %s240, 2
        %s242 = scalar_lea.vmem [#allocation8], %s241
        // Predicated region
        $region41: #{tpu_custom_call.1} parent=31 // pred_check
          %p243 = pneg %p106
        $region42: #{tpu_custom_call.1} parent=31 // pred_check_branch
          %245 = sbr.rel (%p243) target = $region44
        $region43: #{tpu_custom_call.1} parent=31 // pred_region
          %246 = dma.done %s239, 32
        $region44: #{tpu_custom_call.1} parent=31 // pred_fallthru
          _
        %s247 = sand.u32 %s41, 1
        %s248 = scalar_lea.sflag [#allocation4], %s247
        %s249 = sand.u32 %s41, 1
        %s250 = smul.addr %s249, 16
        %s251 = scalar_lea.vmem [#allocation3], %s250
        %p252 = pneg %p54
        %p253 = pneg %p51
        %s254 = sand.u32 %s21, 1
        %s255 = scalar_lea.sflag [#allocation7], %s254
        %s256 = sand.u32 %s67, 1
        %s257 = smul.addr %s256, 256
        %s258 = scalar_lea.vmem [#allocation6], %s257
        %p259 = pneg %p80
        %p260 = pneg %p77
        %s261 = sand.u32 %s21, 1
        %s262 = scalar_lea.sflag [#allocation7], %s261
        %s263 = sand.u32 %s93, 1
        %s264 = smul.addr %s263, 2
        %s265 = scalar_lea.vmem [#allocation8], %s264
        %p266 = pneg %p106
        %p267 = pneg %p103
        %p268 = pneg %p132
        %p269 = pneg %p129
        %s270 = smul.u32 2, %s25
        %s271 = smul.u32 2, %s26
        %s272 = smul.u32 2, %s26
        %s273 = smul.u32 2, %s25
        %p274 = scmp.eq.s32.totalorder %s26, 0
        // Predicated region
        $region45: #{tpu_custom_call.1} parent=31 // pred_check
          %p275 = pneg %p274
        $region46: #{tpu_custom_call.1} parent=31 // pred_check_branch
          %277 = sbr.rel (%p275) target = $region48
        $region47: #{tpu_custom_call.1} parent=31 // pred_region
          %vm278 = vcmask 31744
          %279 = vst.msk [vmem:[#allocation2] sm:$0xff] %vm278, -inf
          %280 = vst.msk [vmem:[#allocation2 + $0x8] sm:$0xff] %vm278, -inf
        $region48: #{tpu_custom_call.1} parent=31 // pred_fallthru
          _
        %v281 = vld [vmem:[%s224] sm:$0xff]
        %v282 = vld [vmem:[%s224 + $0x8] sm:$0xff]
        %v283 = vld [vmem:[%s233] sm:$0xff]
        %v284 = vld [vmem:[%s233 + $0x8] sm:$0xff]
        %v285 = vld [vmem:[%s233 + $0x10] sm:$0xff]
        %v286 = vld [vmem:[%s233 + $0x18] sm:$0xff]
        %v287 = vld [vmem:[%s233 + $0x20] sm:$0xff]
        %v288 = vld [vmem:[%s233 + $0x28] sm:$0xff]
        %v289 = vld [vmem:[%s233 + $0x30] sm:$0xff]
        %v290 = vld [vmem:[%s233 + $0x38] sm:$0xff]
        %v291 = vld [vmem:[%s233 + $0x40] sm:$0xff]
        %v292 = vld [vmem:[%s233 + $0x48] sm:$0xff]
        %v293 = vld [vmem:[%s233 + $0x50] sm:$0xff]
        %v294 = vld [vmem:[%s233 + $0x58] sm:$0xff]
        %v295 = vld [vmem:[%s233 + $0x60] sm:$0xff]
        %v296 = vld [vmem:[%s233 + $0x68] sm:$0xff]
        %v297 = vld [vmem:[%s233 + $0x70] sm:$0xff]
        %v298 = vld [vmem:[%s233 + $0x78] sm:$0xff]
        %v299 = vld [vmem:[%s233 + $0x80] sm:$0xff]
        %v300 = vld [vmem:[%s233 + $0x88] sm:$0xff]
        %v301 = vld [vmem:[%s233 + $0x90] sm:$0xff]
        %v302 = vld [vmem:[%s233 + $0x98] sm:$0xff]
        %v303 = vld [vmem:[%s233 + $0xa0] sm:$0xff]
        %v304 = vld [vmem:[%s233 + $0xa8] sm:$0xff]
        %v305 = vld [vmem:[%s233 + $0xb0] sm:$0xff]
        %v306 = vld [vmem:[%s233 + $0xb8] sm:$0xff]
        %v307 = vld [vmem:[%s233 + $0xc0] sm:$0xff]
        %v308 = vld [vmem:[%s233 + $0xc8] sm:$0xff]
        %v309 = vld [vmem:[%s233 + $0xd0] sm:$0xff]
        %v310 = vld [vmem:[%s233 + $0xd8] sm:$0xff]
        %v311 = vld [vmem:[%s233 + $0xe0] sm:$0xff]
        %v312 = vld [vmem:[%s233 + $0xe8] sm:$0xff]
        %v313 = vld [vmem:[%s233 + $0xf0] sm:$0xff]
        %v314 = vld [vmem:[%s233 + $0xf8] sm:$0xff]
        %v315 = vld [vmem:[%s242] sm:$0x3]
        %v317 = vlaneseq
        %v318 = vshrl.u32 %v317, 7
        %v319 = vsub.s32 0, %v318
        %v320 = vrot.slane %v315, %v319
        %v321 = vlaneseq
        %v322 = vshrl.u32 %v321, 7
        %v323 = vsub.s32 1, %v322
        %v324 = vrot.slane %v315, %v323
        %v329 = vunpack.c.l.b16 %v281
        %v330 = vunpack.c.h.b16 %v281
        %v331 = vunpack.c.l.b16 %v282
        %v332 = vunpack.c.h.b16 %v282
        %v333 = vpack.c.b16 %v331, %v329
        %v334 = vpack.c.b16 %v332, %v330
        %v369 = vunpack.c.l.b16 %v283
        %v370 = vunpack.c.h.b16 %v283
        %v371 = vunpack.c.l.b16 %v284
        %v372 = vunpack.c.h.b16 %v284
        %v373 = vunpack.c.l.b16 %v285
        %v374 = vunpack.c.h.b16 %v285
        %v375 = vunpack.c.l.b16 %v286
        %v376 = vunpack.c.h.b16 %v286
        %v377 = vunpack.c.l.b16 %v287
        %v378 = vunpack.c.h.b16 %v287
        %v379 = vunpack.c.l.b16 %v288
        %v380 = vunpack.c.h.b16 %v288
        %v381 = vunpack.c.l.b16 %v289
        %v382 = vunpack.c.h.b16 %v289
        %v383 = vunpack.c.l.b16 %v290
        %v384 = vunpack.c.h.b16 %v290
        %v385 = vunpack.c.l.b16 %v291
        %v386 = vunpack.c.h.b16 %v291
        %v387 = vunpack.c.l.b16 %v292
        %v388 = vunpack.c.h.b16 %v292
        %v389 = vunpack.c.l.b16 %v293
        %v390 = vunpack.c.h.b16 %v293
        %v391 = vunpack.c.l.b16 %v294
        %v392 = vunpack.c.h.b16 %v294
        %v393 = vunpack.c.l.b16 %v295
        %v394 = vunpack.c.h.b16 %v295
        %v395 = vunpack.c.l.b16 %v296
        %v396 = vunpack.c.h.b16 %v296
        %v397 = vunpack.c.l.b16 %v297
        %v398 = vunpack.c.h.b16 %v297
        %v399 = vunpack.c.l.b16 %v298
        %v400 = vunpack.c.h.b16 %v298
        %v401 = vunpack.c.l.b16 %v299
        %v402 = vunpack.c.h.b16 %v299
        %v403 = vunpack.c.l.b16 %v300
        %v404 = vunpack.c.h.b16 %v300
        %v405 = vunpack.c.l.b16 %v301
        %v406 = vunpack.c.h.b16 %v301
        %v407 = vunpack.c.l.b16 %v302
        %v408 = vunpack.c.h.b16 %v302
        %v409 = vunpack.c.l.b16 %v303
        %v410 = vunpack.c.h.b16 %v303
        %v411 = vunpack.c.l.b16 %v304
        %v412 = vunpack.c.h.b16 %v304
        %v413 = vunpack.c.l.b16 %v305
        %v414 = vunpack.c.h.b16 %v305
        %v415 = vunpack.c.l.b16 %v306
        %v416 = vunpack.c.h.b16 %v306
        %v417 = vunpack.c.l.b16 %v307
        %v418 = vunpack.c.h.b16 %v307
        %v419 = vunpack.c.l.b16 %v308
        %v420 = vunpack.c.h.b16 %v308
        %v421 = vunpack.c.l.b16 %v309
        %v422 = vunpack.c.h.b16 %v309
        %v423 = vunpack.c.l.b16 %v310
        %v424 = vunpack.c.h.b16 %v310
        %v425 = vunpack.c.l.b16 %v311
        %v426 = vunpack.c.h.b16 %v311
        %v427 = vunpack.c.l.b16 %v312
        %v428 = vunpack.c.h.b16 %v312
        %v429 = vunpack.c.l.b16 %v313
        %v430 = vunpack.c.h.b16 %v313
        %v431 = vunpack.c.l.b16 %v314
        %v432 = vunpack.c.h.b16 %v314
        %v433 = vpack.c.b16 %v371, %v369
        %v434 = vpack.c.b16 %v372, %v370
        %v435 = vpack.c.b16 %v375, %v373
        %v436 = vpack.c.b16 %v376, %v374
        %v437 = vpack.c.b16 %v379, %v377
        %v438 = vpack.c.b16 %v380, %v378
        %v439 = vpack.c.b16 %v383, %v381
        %v440 = vpack.c.b16 %v384, %v382
        %v441 = vpack.c.b16 %v387, %v385
        %v442 = vpack.c.b16 %v388, %v386
        %v443 = vpack.c.b16 %v391, %v389
        %v444 = vpack.c.b16 %v392, %v390
        %v445 = vpack.c.b16 %v395, %v393
        %v446 = vpack.c.b16 %v396, %v394
        %v447 = vpack.c.b16 %v399, %v397
        %v448 = vpack.c.b16 %v400, %v398
        %v449 = vpack.c.b16 %v403, %v401
        %v450 = vpack.c.b16 %v404, %v402
        %v451 = vpack.c.b16 %v407, %v405
        %v452 = vpack.c.b16 %v408, %v406
        %v453 = vpack.c.b16 %v411, %v409
        %v454 = vpack.c.b16 %v412, %v410
        %v455 = vpack.c.b16 %v415, %v413
        %v456 = vpack.c.b16 %v416, %v414
        %v457 = vpack.c.b16 %v419, %v417
        %v458 = vpack.c.b16 %v420, %v418
        %v459 = vpack.c.b16 %v423, %v421
        %v460 = vpack.c.b16 %v424, %v422
        %v461 = vpack.c.b16 %v427, %v425
        %v462 = vpack.c.b16 %v428, %v426
        %v463 = vpack.c.b16 %v431, %v429
        %v464 = vpack.c.b16 %v432, %v430
        %497 = vmatprep.subr.bf16.mxu0 %v434
        %498 = vmatpush1.bf16.msra.mxu0 %v433
        %499 = vmatprep.subr.bf16.mxu0 %v436
        %500 = vmatpush1.bf16.msra.mxu0 %v435
        %501 = vmatprep.subr.bf16.mxu0 %v438
        %502 = vmatpush1.bf16.msra.mxu0 %v437
        %503 = vmatprep.subr.bf16.mxu0 %v440
        %504 = vmatpush1.bf16.msra.mxu0 %v439
        %505 = vmatprep.subr.bf16.mxu0 %v442
        %506 = vmatpush1.bf16.msra.mxu0 %v441
        %507 = vmatprep.subr.bf16.mxu0 %v444
        %508 = vmatpush1.bf16.msra.mxu0 %v443
        %509 = vmatprep.subr.bf16.mxu0 %v446
        %510 = vmatpush1.bf16.msra.mxu0 %v445
        %511 = vmatprep.subr.bf16.mxu0 %v448
        %512 = vmatpush1.bf16.msra.mxu0 %v447
        %513 = vmatprep.subr.bf16.mxu0 %v450
        %514 = vmatpush1.bf16.msra.mxu0 %v449
        %515 = vmatprep.subr.bf16.mxu0 %v452
        %516 = vmatpush1.bf16.msra.mxu0 %v451
        %517 = vmatprep.subr.bf16.mxu0 %v454
        %518 = vmatpush1.bf16.msra.mxu0 %v453
        %519 = vmatprep.subr.bf16.mxu0 %v456
        %520 = vmatpush1.bf16.msra.mxu0 %v455
        %521 = vmatprep.subr.bf16.mxu0 %v458
        %522 = vmatpush1.bf16.msra.mxu0 %v457
        %523 = vmatprep.subr.bf16.mxu0 %v460
        %524 = vmatpush1.bf16.msra.mxu0 %v459
        %525 = vmatprep.subr.bf16.mxu0 %v462
        %526 = vmatpush1.bf16.msra.mxu0 %v461
        %527 = vmatprep.subr.bf16.mxu0 %v464
        %528 = vmatpush1.bf16.msra.mxu0 %v463
        %529 = vmatprep.mubr.bf16.mxu0 %v334
        %530 = vmatmul.mubr.bf16.gmra.mrb[0].mxu0 %v333
        %v531 = vpop.f32.mrb[0].mxu0
        %v532 = vadd.f32 %v320, %v531
        %v533 = vpop.f32.mrb[0].mxu0
        %v534 = vadd.f32 %v324, %v533
        %v535 = vpop.f32.mrb[0].mxu0
        %v536 = vadd.f32 %v320, %v535
        %v537 = vpop.f32.mrb[0].mxu0
        %v538 = vadd.f32 %v324, %v537
        %539 = vdwg.mxu0
        %v540 = vmax.f32 %v532, %v534
        %541 = vmax.xlane.f32.xlu0 %v540
        %v542 = vpop.xlane.xlu0 %541
        %v543 = vmax.f32 %v536, %v538
        %544 = vmax.xlane.f32.xlu0 %v543
        %v545 = vpop.xlane.xlu0 %544
        %s546 = smul.u32 %s26, 256
        %v547 = vsub.f32 %v532, %v542
        %v548 = vsub.f32 %v534, %v542
        %v549 = vsub.f32 %v536, %v545
        %v550 = vsub.f32 %v538, %v545
        %v551 = vmul.f32 %v547, 1.442695
        %v552 = vpow.pop %v551
        %v553 = vmul.f32 %v548, 1.442695
        %v554 = vpow.pop %v553
        %v555 = vmul.f32 %v549, 1.442695
        %v556 = vpow.pop %v555
        %v557 = vmul.f32 %v550, 1.442695
        %v558 = vpow.pop %v557
        %s559 = sshra.s32 %s546, 7
        %s560 = sand.u32 %s546, 127
        %s561 = smul.addr %s559, 8
        %s562 = scalar_lea.vmem [#allocation9], %s561
        %563 = vst [vmem:[%s562] sm:$0xff] %v552
        %564 = vst [vmem:[%s562 + $0x8] sm:$0xff] %v554
        %565 = vst [vmem:[%s562 + $0x40] sm:$0xff] %v556
        %566 = vst [vmem:[%s562 + $0x48] sm:$0xff] %v558
        %v567 = vlaneseq
        %v568 = vand.u32 %v567, 127
        %v569 = vstv %s26
        %vm570 = vcmp.eq.s32.totalorder %v568, %v569
        %v571 = vld [vmem:[#allocation2] sm:$0xff]
        %v572 = vld [vmem:[#allocation2 + $0x8] sm:$0xff]
        %v573 = vsel %vm570, %v542, %v571
        %v574 = vsel %vm570, %v545, %v572
        %vm575 = vcmask 31744
        %576 = vst.msk [vmem:[#allocation2] sm:$0xff] %vm575, %v573
        %577 = vst.msk [vmem:[#allocation2 + $0x8] sm:$0xff] %vm575, %v574
        %p578 = scmp.eq.s32.totalorder %s26, 3
        // Predicated region
        $region49: #{tpu_custom_call.1} parent=31 // pred_check
          %p579 = pneg %p578
        $region50: #{tpu_custom_call.1} parent=31 // pred_check_branch
          %581 = sbr.rel (%p579) target = $region52
        $region51: #{tpu_custom_call.1} parent=31 // pred_region
          %v582 = vld [vmem:[#allocation2] sm:$0xff]
          %v583 = vld [vmem:[#allocation2 + $0x8] sm:$0xff]
          %v584 = vsel %vm575, %v582, -inf
          %585 = vmax.xlane.f32.xlu0 %v584
          %v586 = vpop.xlane.xlu0 %585
          %v587 = vsel %vm575, %v583, -inf
          %588 = vmax.xlane.f32.xlu0 %v587
          %v589 = vpop.xlane.xlu0 %588
          %v590 = vsub.f32 %v582, %v586
          %v591 = vsub.f32 %v583, %v589
          %v592 = vmul.f32 %v590, 1.442695
          %v593 = vpow.pop %v592
          %v594 = vmul.f32 %v591, 1.442695
          %v595 = vpow.pop %v594
          %v596 = vld [vmem:[#allocation9] sm:$0xff]
          %v597 = vld [vmem:[#allocation9 + $0x8] sm:$0xff]
          %v598 = vld [vmem:[#allocation9 + $0x40] sm:$0xff]
          %v599 = vld [vmem:[#allocation9 + $0x48] sm:$0xff]
          %v600 = vadd.f32 %v596, %v597
          %601 = vadd.xlane.f32.xlu0 %v600
          %v602 = vpop.xlane.xlu0 %601
          %v603 = vadd.f32 %v598, %v599
          %604 = vadd.xlane.f32.xlu0 %v603
          %v605 = vpop.xlane.xlu0 %604
          %v606 = vmul.f32 %v593, %v602
          %v607 = vmul.f32 %v595, %v605
          %v608 = vadd.f32 %v606, 0.0
          %v609 = vadd.f32 %v607, 0.0
          %v610 = vld [vmem:[#allocation9 + $0x10] sm:$0xff]
          %v611 = vld [vmem:[#allocation9 + $0x18] sm:$0xff]
          %v612 = vld [vmem:[#allocation9 + $0x50] sm:$0xff]
          %v613 = vld [vmem:[#allocation9 + $0x58] sm:$0xff]
          %v614 = vadd.f32 %v610, %v611
          %615 = vadd.xlane.f32.xlu0 %v614
          %v616 = vpop.xlane.xlu0 %615
          %v617 = vadd.f32 %v612, %v613
          %618 = vadd.xlane.f32.xlu0 %v617
          %v619 = vpop.xlane.xlu0 %618
          %v620 = vmul.f32 %v593, %v616
          %v621 = vmul.f32 %v595, %v619
          %624 = vrot.lane.b32.xlu0 %v620, 127
          %v625 = vpop.permute.xlu0 %624
          %626 = vrot.lane.b32.xlu0 %v621, 127
          %v627 = vpop.permute.xlu0 %626
          %v630 = vadd.f32 %v608, %v625
          %v631 = vadd.f32 %v609, %v627
          %v632 = vld [vmem:[#allocation9 + $0x20] sm:$0xff]
          %v633 = vld [vmem:[#allocation9 + $0x28] sm:$0xff]
          %v634 = vld [vmem:[#allocation9 + $0x60] sm:$0xff]
          %v635 = vld [vmem:[#allocation9 + $0x68] sm:$0xff]
          %v636 = vadd.f32 %v632, %v633
          %637 = vadd.xlane.f32.xlu0 %v636
          %v638 = vpop.xlane.xlu0 %637
          %v639 = vadd.f32 %v634, %v635
          %640 = vadd.xlane.f32.xlu0 %v639
          %v641 = vpop.xlane.xlu0 %640
          %v642 = vmul.f32 %v593, %v638
          %v643 = vmul.f32 %v595, %v641
          %646 = vrot.lane.b32.xlu0 %v642, 126
          %v647 = vpop.permute.xlu0 %646
          %648 = vrot.lane.b32.xlu0 %v643, 126
          %v649 = vpop.permute.xlu0 %648
          %v652 = vadd.f32 %v630, %v647
          %v653 = vadd.f32 %v631, %v649
          %v654 = vld [vmem:[#allocation9 + $0x30] sm:$0xff]
          %v655 = vld [vmem:[#allocation9 + $0x38] sm:$0xff]
          %v656 = vld [vmem:[#allocation9 + $0x70] sm:$0xff]
          %v657 = vld [vmem:[#allocation9 + $0x78] sm:$0xff]
          %v658 = vadd.f32 %v654, %v655
          %659 = vadd.xlane.f32.xlu0 %v658
          %v660 = vpop.xlane.xlu0 %659
          %v661 = vadd.f32 %v656, %v657
          %662 = vadd.xlane.f32.xlu0 %v661
          %v663 = vpop.xlane.xlu0 %662
          %v664 = vmul.f32 %v593, %v660
          %v665 = vmul.f32 %v595, %v663
          %668 = vrot.lane.b32.xlu0 %v664, 125
          %v669 = vpop.permute.xlu0 %668
          %670 = vrot.lane.b32.xlu0 %v665, 125
          %v671 = vpop.permute.xlu0 %670
          %v674 = vadd.f32 %v652, %v669
          %v675 = vadd.f32 %v653, %v671
          %v676 = vrcp.pop %v674
          %v677 = vmul.f32 1.0, %v676
          %v678 = vrcp.pop %v675
          %v679 = vmul.f32 1.0, %v678
          %v680 = vmul.f32 %v593, %v677
          %v681 = vmul.f32 %v595, %v679
          %683 = vset.pattern.permute.xlu0 0
          %684 = vperm.xlu0 %683, %v680
          %v685 = vpop.permute.xlu0 %684
          %688 = vset.pattern.permute.xlu0 0
          %689 = vperm.xlu0 %688, %v681
          %v690 = vpop.permute.xlu0 %689
          %v692 = vmul.f32 %v596, %v685
          %v693 = vmul.f32 %v597, %v685
          %v694 = vmul.f32 %v598, %v690
          %v695 = vmul.f32 %v599, %v690
          %696 = vst [vmem:[#allocation9] sm:$0xff] %v692
          %697 = vst [vmem:[#allocation9 + $0x8] sm:$0xff] %v693
          %698 = vst [vmem:[#allocation9 + $0x40] sm:$0xff] %v694
          %699 = vst [vmem:[#allocation9 + $0x48] sm:$0xff] %v695
          %702 = vrot.lane.b32.xlu0 %v677, 1
          %v703 = vpop.permute.xlu0 %702
          %704 = vrot.lane.b32.xlu0 %v679, 1
          %v705 = vpop.permute.xlu0 %704
          %v708 = vmul.f32 %v593, %v703
          %v709 = vmul.f32 %v595, %v705
          %v710 = vld [vmem:[#allocation9 + $0x10] sm:$0xff]
          %v711 = vld [vmem:[#allocation9 + $0x18] sm:$0xff]
          %v712 = vld [vmem:[#allocation9 + $0x50] sm:$0xff]
          %v713 = vld [vmem:[#allocation9 + $0x58] sm:$0xff]
          %715 = vset.pattern.permute.xlu0 1
          %716 = vperm.xlu0 %715, %v708
          %v717 = vpop.permute.xlu0 %716
          %720 = vset.pattern.permute.xlu0 1
          %721 = vperm.xlu0 %720, %v709
          %v722 = vpop.permute.xlu0 %721
          %v724 = vmul.f32 %v710, %v717
          %v725 = vmul.f32 %v711, %v717
          %v726 = vmul.f32 %v712, %v722
          %v727 = vmul.f32 %v713, %v722
          %728 = vst [vmem:[#allocation9 + $0x10] sm:$0xff] %v724
          %729 = vst [vmem:[#allocation9 + $0x18] sm:$0xff] %v725
          %730 = vst [vmem:[#allocation9 + $0x50] sm:$0xff] %v726
          %731 = vst [vmem:[#allocation9 + $0x58] sm:$0xff] %v727
          %732 = vrot.lane.b32.xlu0 %v677, 2
          %v733 = vpop.permute.xlu0 %732
          %734 = vrot.lane.b32.xlu0 %v679, 2
          %v735 = vpop.permute.xlu0 %734
          %v738 = vmul.f32 %v593, %v733
          %v739 = vmul.f32 %v595, %v735
          %v740 = vld [vmem:[#allocation9 + $0x20] sm:$0xff]
          %v741 = vld [vmem:[#allocation9 + $0x28] sm:$0xff]
          %v742 = vld [vmem:[#allocation9 + $0x60] sm:$0xff]
          %v743 = vld [vmem:[#allocation9 + $0x68] sm:$0xff]
          %745 = vset.pattern.permute.xlu0 2
          %746 = vperm.xlu0 %745, %v738
          %v747 = vpop.permute.xlu0 %746
          %750 = vset.pattern.permute.xlu0 2
          %751 = vperm.xlu0 %750, %v739
          %v752 = vpop.permute.xlu0 %751
          %v754 = vmul.f32 %v740, %v747
          %v755 = vmul.f32 %v741, %v747
          %v756 = vmul.f32 %v742, %v752
          %v757 = vmul.f32 %v743, %v752
          %758 = vst [vmem:[#allocation9 + $0x20] sm:$0xff] %v754
          %759 = vst [vmem:[#allocation9 + $0x28] sm:$0xff] %v755
          %760 = vst [vmem:[#allocation9 + $0x60] sm:$0xff] %v756
          %761 = vst [vmem:[#allocation9 + $0x68] sm:$0xff] %v757
          %762 = vrot.lane.b32.xlu0 %v677, 3
          %v763 = vpop.permute.xlu0 %762
          %764 = vrot.lane.b32.xlu0 %v679, 3
          %v765 = vpop.permute.xlu0 %764
          %v768 = vmul.f32 %v593, %v763
          %v769 = vmul.f32 %v595, %v765
          %v770 = vld [vmem:[#allocation9 + $0x30] sm:$0xff]
          %v771 = vld [vmem:[#allocation9 + $0x38] sm:$0xff]
          %v772 = vld [vmem:[#allocation9 + $0x70] sm:$0xff]
          %v773 = vld [vmem:[#allocation9 + $0x78] sm:$0xff]
          %775 = vset.pattern.permute.xlu0 3
          %776 = vperm.xlu0 %775, %v768
          %v777 = vpop.permute.xlu0 %776
          %780 = vset.pattern.permute.xlu0 3
          %781 = vperm.xlu0 %780, %v769
          %v782 = vpop.permute.xlu0 %781
          %v784 = vmul.f32 %v770, %v777
          %v785 = vmul.f32 %v771, %v777
          %v786 = vmul.f32 %v772, %v782
          %v787 = vmul.f32 %v773, %v782
          %788 = vst [vmem:[#allocation9 + $0x30] sm:$0xff] %v784
          %789 = vst [vmem:[#allocation9 + $0x38] sm:$0xff] %v785
          %790 = vst [vmem:[#allocation9 + $0x70] sm:$0xff] %v786
          %791 = vst [vmem:[#allocation9 + $0x78] sm:$0xff] %v787
        $region52: #{tpu_custom_call.1} parent=31 // pred_fallthru
          _
        // Predicated region
        $region53: #{tpu_custom_call.1} parent=31 // pred_check
          %p792 = pneg %p129
        $region54: #{tpu_custom_call.1} parent=31 // pred_check_branch
          %794 = sbr.rel (%p792) target = $region56
        $region55: #{tpu_custom_call.1} parent=31 // pred_region
          %s795 = smul.u32 2, %s25
          %s797 = ssub.s32 2048, 2048
          %798 = vsyncadd [#allocation5], %s797
          %s799 = smul.addr %s795, 8
          %s800 = smul.addr %s799, 128
          %s801 = scalar_lea.hbm %s3, %s800
          %s802 = sshll.u32 [#allocation9], 4
          %s803 = int_to_ptr.vmem [resolvable:$true] %s802
          %808 = dma.vmem_to_hbm [thread:$0]  %s803, 2048, %s801, [#allocation5], 1024, 1024, 64
        $region56: #{tpu_custom_call.1} parent=31 // pred_fallthru
          _
        // Predicated region
        $region57: #{tpu_custom_call.1} parent=31 // pred_check
          %p809 = pneg %p129
        $region58: #{tpu_custom_call.1} parent=31 // pred_check_branch
          %811 = sbr.rel (%p809) target = $region60
        $region59: #{tpu_custom_call.1} parent=31 // pred_region
          %812 = dma.done [#allocation5], 2048
        $region60: #{tpu_custom_call.1} parent=31 // pred_fallthru
          _
      $region32: #{tpu_custom_call.1} parent=5 // pred_fallthru
        _
      %p813 = scmp.le.s32.totalorder 2, %s16
      // Predicated region
      $region61: #{tpu_custom_call.1} parent=5 // pred_check
        %p814 = pneg %p813
      $region62: #{tpu_custom_call.1} parent=5 // pred_check_branch
        %816 = sbr.rel (%p814) target = $region64
      $region63: #{tpu_custom_call.1} parent=5 // pred_region
        %s817 = ssub.s32 %s16, 2
      $region64: #{tpu_custom_call.1} parent=5 // pred_fallthru
        _
    $region6: #{tpu_custom_call.1} parent=1 // loop_footer
      %s20 = sadd.s32 1, %s16
    $region7: #{tpu_custom_call.1} parent=1 // loop_footer_branch
      %15 = sbr.rel target = $region3
    $region8: #{tpu_custom_call.1} parent=1 // loop_exit
      _
    %818 = vsyncpa [#allocation4], 1
    %s819 = scalar_lea.sflag [#allocation4], 1
    %820 = vsyncpa %s819, 1
    %821 = vsyncpa [#allocation7], 1
    %s822 = scalar_lea.sflag [#allocation7], 1
    %823 = vsyncpa %s822, 1
    %824 = vsyncpa [#allocation5], 1
    %s825 = scalar_lea.sflag [#allocation5], 1
    %826 = vsyncpa %s825, 1

// kernel: tpu_custom_call.1
$region0: #{tpu_custom_call.1}
  #allocation0 [shape = 'u32[]', space=smem, size = 0x4, offset = 0x4, fixed_abs, tag = 'smem constant byte address 0x4 - core index']
  #allocation1 [shape = 'u32[144,128]{1,0:T(1,128)}', space=vmem, size = 0x12000, scoped, tag = 'internal scratch']
  #allocation2 [shape = 'f32[16,4]{1,0:T(8,128)}', space=vmem, size = 0x2000, scoped, tag = 'scratch operand']
  %s0 = inlined_call_operand.hbm [shape: bf16[32,256], index: 0, kind: input, shape index: {}]
  %s1 = inlined_call_operand.hbm [shape: bf16[256,1024], index: 1, kind: input, shape index: {}]
  %s2 = inlined_call_operand.hbm [shape: f32[1,1024], index: 2, kind: input, shape index: {}]
  %s3 = inlined_call_operand.hbm [shape: f32[32,1024], index: 3, kind: output, shape index: {}]
  %s4 = sld [smem:[#allocation0]]
  $region65: #{tpu_custom_call.1} parent=0
    _
  %s6 = ssub.s32 1, %s4
  %s7 = scalar_select 0, %s6, %s4
  $region1: #{tpu_custom_call.1} parent=0
    #allocation3 [shape = 'u8[16384]{0}', space=vmem, size = 0x4000, scoped, tag = 'input window, operand 0']
    #allocation4 [shape = 's32[2]{0}', space=sflag, size = 0x8, scoped, tag = 'scoped memory for tpu_custom_call.1']
    #allocation5 [shape = 's32[2]{0}', space=sflag, size = 0x8, scoped, tag = 'scoped memory for tpu_custom_call.1']
    #allocation6 [shape = 'u8[262144]{0}', space=vmem, size = 0x40000, scoped, tag = 'input window, operand 1']
    #allocation7 [shape = 's32[2]{0}', space=sflag, size = 0x8, scoped, tag = 'scoped memory for tpu_custom_call.1']
    #allocation8 [shape = 'u8[2048]{0}', space=vmem, size = 0x800, scoped, tag = 'input window, operand 2']
    #allocation9 [shape = 'u8[131072]{0}', space=vmem, size = 0x20000, scoped, tag = 'output window, operand 0']
    %8 = vsyncpa [#allocation4], 0
    %s9 = scalar_lea.sflag [#allocation4], 1
    %10 = vsyncpa %s9, 0
    %11 = vsyncpa [#allocation7], 0
    %s12 = scalar_lea.sflag [#allocation7], 1
    %13 = vsyncpa %s12, 0
    %14 = vsyncpa [#allocation5], 0
    %s15 = scalar_lea.sflag [#allocation5], 1
    %16 = vsyncpa %s15, 0
    loop: start=0, step=1, limit=10
    $region2: #{tpu_custom_call.1} parent=1 // loop_pre_header
      _
    $region3: #{tpu_custom_call.1} parent=1 // loop_header
      %s18 = sphi 0, %s22
      %p19 = scmp.ge.s32.totalorder %s18, 10
      %s25 = sphi 0, %s37
      %s26 = sphi 0, %s33
      %s27 = sphi 0, %s25
      %s28 = sphi 0, %s26
      %s29 = sphi 0, %s27
      %s30 = sphi 0, %s28
      %s40 = sphi 0, %s42
      %s43 = sphi 0, %s40
      %s44 = sphi 0, %s43
      %s60 = sphi 0, %s44
      %s66 = sphi 0, %s68
      %s69 = sphi 0, %s66
      %s70 = sphi 0, %s69
      %s86 = sphi 0, %s70
      %s92 = sphi 0, %s94
      %s95 = sphi 0, %s92
      %s96 = sphi 0, %s95
      %s112 = sphi 0, %s96
      %s118 = sphi 0, %s120
      %s121 = sphi 0, %s118
      %s122 = sphi 0, %s121
      %s138 = sphi 0, %s122
    $region4: #{tpu_custom_call.1} parent=1 // loop_header_branch
      %21 = sbr.rel (%p19) target = $region8
    $region5: #{tpu_custom_call.1} parent=1 // loop_body
      %s23 = ssub.s32 %s18, 1
      %s24 = ssub.s32 %s18, 2
      %s31 = sadd.s32 1, %s26
      %p32 = scmp.ge.s32.totalorder %s31, 4
      %s33 = scalar_select %p32, 0, %s31
      %s34 = sadd.s32 1, %s25
      %s35 = scalar_select %p32, %s34, %s25
      %p36 = scmp.ge.s32.totalorder %s35, 2
      %s37 = scalar_select %p36, 0, %s35
      %s38 = ssub.s32 %s25, %s37
      %p39 = scmp.eq.s32.totalorder %s38, 0
      %s41 = sadd.s32 %s40, 1
      %s42 = scalar_select %p39, %s40, %s41
      %p45 = pneg %p39
      %p46 = scmp.eq.s32.totalorder %s18, 7
      %p47 = por %p45, %p46
      %p48 = scmp.ne.s32.totalorder %s40, %s43
      %p49 = scmp.eq.s32.totalorder %s18, 0
      %p50 = por %p48, %p49
      %p51 = scmp.ne.s32.totalorder %s40, %s43
      %p52 = scmp.eq.s32.totalorder %s23, 7
      %p53 = por %p51, %p52
      %p54 = scmp.ne.s32.totalorder %s43, %s44
      %p55 = scmp.eq.s32.totalorder %s23, 0
      %p56 = por %p54, %p55
      %p57 = scmp.ne.s32.totalorder %s43, %s44
      %p58 = scmp.eq.s32.totalorder %s24, 7
      %p59 = por %p57, %p58
      %p61 = scmp.ne.s32.totalorder %s44, %s60
      %p62 = scmp.eq.s32.totalorder %s24, 0
      %p63 = por %p61, %p62
      %s64 = ssub.s32 %s26, %s33
      %p65 = scmp.eq.s32.totalorder %s64, 0
      %s67 = sadd.s32 %s66, 1
      %s68 = scalar_select %p65, %s66, %s67
      %p71 = pneg %p65
      %p72 = scmp.eq.s32.totalorder %s18, 7
      %p73 = por %p71, %p72
      %p74 = scmp.ne.s32.totalorder %s66, %s69
      %p75 = scmp.eq.s32.totalorder %s18, 0
      %p76 = por %p74, %p75
      %p77 = scmp.ne.s32.totalorder %s66, %s69
      %p78 = scmp.eq.s32.totalorder %s23, 7
      %p79 = por %p77, %p78
      %p80 = scmp.ne.s32.totalorder %s69, %s70
      %p81 = scmp.eq.s32.totalorder %s23, 0
      %p82 = por %p80, %p81
      %p83 = scmp.ne.s32.totalorder %s69, %s70
      %p84 = scmp.eq.s32.totalorder %s24, 7
      %p85 = por %p83, %p84
      %p87 = scmp.ne.s32.totalorder %s70, %s86
      %p88 = scmp.eq.s32.totalorder %s24, 0
      %p89 = por %p87, %p88
      %s90 = ssub.s32 %s26, %s33
      %p91 = scmp.eq.s32.totalorder %s90, 0
      %s93 = sadd.s32 %s92, 1
      %s94 = scalar_select %p91, %s92, %s93
      %p97 = pneg %p91
      %p98 = scmp.eq.s32.totalorder %s18, 7
      %p99 = por %p97, %p98
      %p100 = scmp.ne.s32.totalorder %s92, %s95
      %p101 = scmp.eq.s32.totalorder %s18, 0
      %p102 = por %p100, %p101
      %p103 = scmp.ne.s32.totalorder %s92, %s95
      %p104 = scmp.eq.s32.totalorder %s23, 7
      %p105 = por %p103, %p104
      %p106 = scmp.ne.s32.totalorder %s95, %s96
      %p107 = scmp.eq.s32.totalorder %s23, 0
      %p108 = por %p106, %p107
      %p109 = scmp.ne.s32.totalorder %s95, %s96
      %p110 = scmp.eq.s32.totalorder %s24, 7
      %p111 = por %p109, %p110
      %p113 = scmp.ne.s32.totalorder %s96, %s112
      %p114 = scmp.eq.s32.totalorder %s24, 0
      %p115 = por %p113, %p114
      %s116 = ssub.s32 %s25, %s37
      %p117 = scmp.eq.s32.totalorder %s116, 0
      %s119 = sadd.s32 %s118, 1
      %s120 = scalar_select %p117, %s118, %s119
      %p123 = pneg %p117
      %p124 = scmp.eq.s32.totalorder %s18, 7
      %p125 = por %p123, %p124
      %p126 = scmp.ne.s32.totalorder %s118, %s121
      %p127 = scmp.eq.s32.totalorder %s18, 0
      %p128 = por %p126, %p127
      %p129 = scmp.ne.s32.totalorder %s118, %s121
      %p130 = scmp.eq.s32.totalorder %s23, 7
      %p131 = por %p129, %p130
      %p132 = scmp.ne.s32.totalorder %s121, %s122
      %p133 = scmp.eq.s32.totalorder %s23, 0
      %p134 = por %p132, %p133
      %p135 = scmp.ne.s32.totalorder %s121, %s122
      %p136 = scmp.eq.s32.totalorder %s24, 7
      %p137 = por %p135, %p136
      %p139 = scmp.ne.s32.totalorder %s122, %s138
      %p140 = scmp.eq.s32.totalorder %s24, 0
      %p141 = por %p139, %p140
      %p142 = scmp.le.s32.totalorder 1, %s18
      %p143 = scmp.lt.s32.totalorder %s18, 9
      %p144 = pnand %p142, %p143
      %p145 = pneg %p144
      // Predicated region
      $region9: #{tpu_custom_call.1} parent=5 // pred_check
        _
      $region10: #{tpu_custom_call.1} parent=5 // pred_check_branch
        %147 = sbr.rel (%p144) target = $region12
      $region11: #{tpu_custom_call.1} parent=5 // pred_region
        %s148 = ssub.s32 %s18, 1
      $region12: #{tpu_custom_call.1} parent=5 // pred_fallthru
        _
      %p149 = scmp.lt.s32.totalorder %s18, 8
      // Predicated region
      $region13: #{tpu_custom_call.1} parent=5 // pred_check
        %p150 = pneg %p149
      $region14: #{tpu_custom_call.1} parent=5 // pred_check_branch
        %152 = sbr.rel (%p150) target = $region16
      $region15: #{tpu_custom_call.1} parent=5 // pred_region
        // Predicated region
        $region17: #{tpu_custom_call.1} parent=15 // pred_check
          %p153 = pneg %p50
        $region18: #{tpu_custom_call.1} parent=15 // pred_check_branch
          %155 = sbr.rel (%p153) target = $region20
        $region19: #{tpu_custom_call.1} parent=15 // pred_region
          %s156 = sand.u32 %s40, 1
          %s157 = scalar_lea.sflag [#allocation4], %s156
          %s158 = sand.u32 %s40, 1
          %s159 = smul.addr %s158, 16
          %s160 = scalar_lea.vmem [#allocation3], %s159
          %s161 = smul.u32 2, %s25
          %s163 = ssub.s32 256, 256
          %164 = vsyncadd %s157, %s163
          %s165 = smul.addr %s161, 2
          %s166 = smul.addr %s165, 64
          %s167 = scalar_lea.hbm %s0, %s166
          %s168 = sshll.u32 %s160, 4
          %s169 = int_to_ptr.vmem [resolvable:$true] %s168
          %174 = dma.hbm_to_vmem [thread:$0]  %s167, 256, %s169, %s157, 128, 128, 8
        $region20: #{tpu_custom_call.1} parent=15 // pred_fallthru
          _
        // Predicated region
        $region21: #{tpu_custom_call.1} parent=15 // pred_check
          %p175 = pneg %p76
        $region22: #{tpu_custom_call.1} parent=15 // pred_check_branch
          %177 = sbr.rel (%p175) target = $region24
        $region23: #{tpu_custom_call.1} parent=15 // pred_region
          %s178 = sand.u32 %s18, 1
          %s179 = scalar_lea.sflag [#allocation7], %s178
          %s180 = sand.u32 %s66, 1
          %s181 = smul.addr %s180, 256
          %s182 = scalar_lea.vmem [#allocation6], %s181
          %s183 = smul.u32 2, %s26
          %s185 = ssub.s32 4096, 4096
          %186 = vsyncadd %s179, %s185
          %s187 = smul.addr %s183, 64
          %s188 = scalar_lea.hbm %s1, %s187
          %s189 = sshll.u32 %s182, 4
          %s190 = int_to_ptr.vmem [resolvable:$true] %s189
          %195 = dma.hbm_to_vmem [thread:$0]  %s188, 4096, %s190, %s179, 512, 128, 8
        $region24: #{tpu_custom_call.1} parent=15 // pred_fallthru
          _
        // Predicated region
        $region25: #{tpu_custom_call.1} parent=15 // pred_check
          %p196 = pneg %p102
        $region26: #{tpu_custom_call.1} parent=15 // pred_check_branch
          %198 = sbr.rel (%p196) target = $region28
        $region27: #{tpu_custom_call.1} parent=15 // pred_region
          %s199 = sand.u32 %s18, 1
          %s200 = scalar_lea.sflag [#allocation7], %s199
          %s201 = sand.u32 %s92, 1
          %s202 = smul.addr %s201, 2
          %s203 = scalar_lea.vmem [#allocation8], %s202
          %s204 = smul.u32 2, %s26
          %s206 = ssub.s32 32, 32
          %207 = vsyncadd %s200, %s206
          %s208 = smul.addr %s204, 16
          %s209 = scalar_lea.hbm %s2, %s208
          %s211 = sshll.u32 %s203, 4
          %s212 = int_to_ptr.vmem [resolvable:$true] %s211
          %214 = dma.hbm_to_vmem [thread:$0]  %s209, 32, %s212, %s200
        $region28: #{tpu_custom_call.1} parent=15 // pred_fallthru
          _
      $region16: #{tpu_custom_call.1} parent=5 // pred_fallthru
        _
      %p215 = scmp.le.s32.totalorder 1, %s18
      %p216 = scmp.lt.s32.totalorder %s18, 9
      %p217 = pnand %p215, %p216
      %p218 = pneg %p217
      // Predicated region
      $region29: #{tpu_custom_call.1} parent=5 // pred_check
        _
      $region30: #{tpu_custom_call.1} parent=5 // pred_check_branch
        %220 = sbr.rel (%p217) target = $region32
      $region31: #{tpu_custom_call.1} parent=5 // pred_region
        %s221 = ssub.s32 %s18, 1
        %s222 = sand.u32 %s43, 1
        %s223 = scalar_lea.sflag [#allocation4], %s222
        %s224 = sand.u32 %s43, 1
        %s225 = smul.addr %s224, 16
        %s226 = scalar_lea.vmem [#allocation3], %s225
        // Predicated region
        $region33: #{tpu_custom_call.1} parent=31 // pred_check
          %p227 = pneg %p56
        $region34: #{tpu_custom_call.1} parent=31 // pred_check_branch
          %229 = sbr.rel (%p227) target = $region36
        $region35: #{tpu_custom_call.1} parent=31 // pred_region
          %230 = dma.done %s223, 256
        $region36: #{tpu_custom_call.1} parent=31 // pred_fallthru
          _
        %s231 = sand.u32 %s23, 1
        %s232 = scalar_lea.sflag [#allocation7], %s231
        %s233 = sand.u32 %s69, 1
        %s234 = smul.addr %s233, 256
        %s235 = scalar_lea.vmem [#allocation6], %s234
        // Predicated region
        $region37: #{tpu_custom_call.1} parent=31 // pred_check
          %p236 = pneg %p82
        $region38: #{tpu_custom_call.1} parent=31 // pred_check_branch
          %238 = sbr.rel (%p236) target = $region40
        $region39: #{tpu_custom_call.1} parent=31 // pred_region
          %239 = dma.done %s232, 4096
        $region40: #{tpu_custom_call.1} parent=31 // pred_fallthru
          _
        %s240 = sand.u32 %s23, 1
        %s241 = scalar_lea.sflag [#allocation7], %s240
        %s242 = sand.u32 %s95, 1
        %s243 = smul.addr %s242, 2
        %s244 = scalar_lea.vmem [#allocation8], %s243
        // Predicated region
        $region41: #{tpu_custom_call.1} parent=31 // pred_check
          %p245 = pneg %p108
        $region42: #{tpu_custom_call.1} parent=31 // pred_check_branch
          %247 = sbr.rel (%p245) target = $region44
        $region43: #{tpu_custom_call.1} parent=31 // pred_region
          %248 = dma.done %s241, 32
        $region44: #{tpu_custom_call.1} parent=31 // pred_fallthru
          _
        %s249 = sand.u32 %s43, 1
        %s250 = scalar_lea.sflag [#allocation4], %s249
        %s251 = sand.u32 %s43, 1
        %s252 = smul.addr %s251, 16
        %s253 = scalar_lea.vmem [#allocation3], %s252
        %p254 = pneg %p56
        %p255 = pneg %p53
        %s256 = sand.u32 %s23, 1
        %s257 = scalar_lea.sflag [#allocation7], %s256
        %s258 = sand.u32 %s69, 1
        %s259 = smul.addr %s258, 256
        %s260 = scalar_lea.vmem [#allocation6], %s259
        %p261 = pneg %p82
        %p262 = pneg %p79
        %s263 = sand.u32 %s23, 1
        %s264 = scalar_lea.sflag [#allocation7], %s263
        %s265 = sand.u32 %s95, 1
        %s266 = smul.addr %s265, 2
        %s267 = scalar_lea.vmem [#allocation8], %s266
        %p268 = pneg %p108
        %p269 = pneg %p105
        %p270 = pneg %p134
        %p271 = pneg %p131
        %s272 = sand.u32 %s121, 1
        %s273 = scalar_lea.sflag [#allocation5], %s272
        %s274 = sand.u32 %s121, 1
        %s275 = smul.addr %s274, 128
        %s276 = scalar_lea.vmem [#allocation9], %s275
        %s277 = smul.u32 2, %s27
        %s278 = smul.u32 2, %s28
        %s279 = smul.u32 2, %s28
        %s280 = smul.u32 2, %s27
        %p281 = scmp.eq.s32.totalorder %s28, 0
        // Predicated region
        $region45: #{tpu_custom_call.1} parent=31 // pred_check
          %p282 = pneg %p281
        $region46: #{tpu_custom_call.1} parent=31 // pred_check_branch
          %284 = sbr.rel (%p282) target = $region48
        $region47: #{tpu_custom_call.1} parent=31 // pred_region
          %vm285 = vcmask 31744
          %286 = vst.msk [vmem:[#allocation2] sm:$0xff] %vm285, -inf
          %287 = vst.msk [vmem:[#allocation2 + $0x8] sm:$0xff] %vm285, -inf
        $region48: #{tpu_custom_call.1} parent=31 // pred_fallthru
          _
        %v288 = vld [vmem:[%s226] sm:$0xff]
        %v289 = vld [vmem:[%s226 + $0x8] sm:$0xff]
        %v290 = vld [vmem:[%s235] sm:$0xff]
        %v291 = vld [vmem:[%s235 + $0x8] sm:$0xff]
        %v292 = vld [vmem:[%s235 + $0x10] sm:$0xff]
        %v293 = vld [vmem:[%s235 + $0x18] sm:$0xff]
        %v294 = vld [vmem:[%s235 + $0x20] sm:$0xff]
        %v295 = vld [vmem:[%s235 + $0x28] sm:$0xff]
        %v296 = vld [vmem:[%s235 + $0x30] sm:$0xff]
        %v297 = vld [vmem:[%s235 + $0x38] sm:$0xff]
        %v298 = vld [vmem:[%s235 + $0x40] sm:$0xff]
        %v299 = vld [vmem:[%s235 + $0x48] sm:$0xff]
        %v300 = vld [vmem:[%s235 + $0x50] sm:$0xff]
        %v301 = vld [vmem:[%s235 + $0x58] sm:$0xff]
        %v302 = vld [vmem:[%s235 + $0x60] sm:$0xff]
        %v303 = vld [vmem:[%s235 + $0x68] sm:$0xff]
        %v304 = vld [vmem:[%s235 + $0x70] sm:$0xff]
        %v305 = vld [vmem:[%s235 + $0x78] sm:$0xff]
        %v306 = vld [vmem:[%s235 + $0x80] sm:$0xff]
        %v307 = vld [vmem:[%s235 + $0x88] sm:$0xff]
        %v308 = vld [vmem:[%s235 + $0x90] sm:$0xff]
        %v309 = vld [vmem:[%s235 + $0x98] sm:$0xff]
        %v310 = vld [vmem:[%s235 + $0xa0] sm:$0xff]
        %v311 = vld [vmem:[%s235 + $0xa8] sm:$0xff]
        %v312 = vld [vmem:[%s235 + $0xb0] sm:$0xff]
        %v313 = vld [vmem:[%s235 + $0xb8] sm:$0xff]
        %v314 = vld [vmem:[%s235 + $0xc0] sm:$0xff]
        %v315 = vld [vmem:[%s235 + $0xc8] sm:$0xff]
        %v316 = vld [vmem:[%s235 + $0xd0] sm:$0xff]
        %v317 = vld [vmem:[%s235 + $0xd8] sm:$0xff]
        %v318 = vld [vmem:[%s235 + $0xe0] sm:$0xff]
        %v319 = vld [vmem:[%s235 + $0xe8] sm:$0xff]
        %v320 = vld [vmem:[%s235 + $0xf0] sm:$0xff]
        %v321 = vld [vmem:[%s235 + $0xf8] sm:$0xff]
        %v322 = vld [vmem:[%s244] sm:$0x3]
        %v324 = vlaneseq
        %v325 = vshrl.u32 %v324, 7
        %v326 = vsub.s32 0, %v325
        %v327 = vrot.slane %v322, %v326
        %v328 = vlaneseq
        %v329 = vshrl.u32 %v328, 7
        %v330 = vsub.s32 1, %v329
        %v331 = vrot.slane %v322, %v330
        %v336 = vunpack.c.l.b16 %v288
        %v337 = vunpack.c.h.b16 %v288
        %v338 = vunpack.c.l.b16 %v289
        %v339 = vunpack.c.h.b16 %v289
        %v340 = vpack.c.b16 %v338, %v336
        %v341 = vpack.c.b16 %v339, %v337
        %v376 = vunpack.c.l.b16 %v290
        %v377 = vunpack.c.h.b16 %v290
        %v378 = vunpack.c.l.b16 %v291
        %v379 = vunpack.c.h.b16 %v291
        %v380 = vunpack.c.l.b16 %v292
        %v381 = vunpack.c.h.b16 %v292
        %v382 = vunpack.c.l.b16 %v293
        %v383 = vunpack.c.h.b16 %v293
        %v384 = vunpack.c.l.b16 %v294
        %v385 = vunpack.c.h.b16 %v294
        %v386 = vunpack.c.l.b16 %v295
        %v387 = vunpack.c.h.b16 %v295
        %v388 = vunpack.c.l.b16 %v296
        %v389 = vunpack.c.h.b16 %v296
        %v390 = vunpack.c.l.b16 %v297
        %v391 = vunpack.c.h.b16 %v297
        %v392 = vunpack.c.l.b16 %v298
        %v393 = vunpack.c.h.b16 %v298
        %v394 = vunpack.c.l.b16 %v299
        %v395 = vunpack.c.h.b16 %v299
        %v396 = vunpack.c.l.b16 %v300
        %v397 = vunpack.c.h.b16 %v300
        %v398 = vunpack.c.l.b16 %v301
        %v399 = vunpack.c.h.b16 %v301
        %v400 = vunpack.c.l.b16 %v302
        %v401 = vunpack.c.h.b16 %v302
        %v402 = vunpack.c.l.b16 %v303
        %v403 = vunpack.c.h.b16 %v303
        %v404 = vunpack.c.l.b16 %v304
        %v405 = vunpack.c.h.b16 %v304
        %v406 = vunpack.c.l.b16 %v305
        %v407 = vunpack.c.h.b16 %v305
        %v408 = vunpack.c.l.b16 %v306
        %v409 = vunpack.c.h.b16 %v306
        %v410 = vunpack.c.l.b16 %v307
        %v411 = vunpack.c.h.b16 %v307
        %v412 = vunpack.c.l.b16 %v308
        %v413 = vunpack.c.h.b16 %v308
        %v414 = vunpack.c.l.b16 %v309
        %v415 = vunpack.c.h.b16 %v309
        %v416 = vunpack.c.l.b16 %v310
        %v417 = vunpack.c.h.b16 %v310
        %v418 = vunpack.c.l.b16 %v311
        %v419 = vunpack.c.h.b16 %v311
        %v420 = vunpack.c.l.b16 %v312
        %v421 = vunpack.c.h.b16 %v312
        %v422 = vunpack.c.l.b16 %v313
        %v423 = vunpack.c.h.b16 %v313
        %v424 = vunpack.c.l.b16 %v314
        %v425 = vunpack.c.h.b16 %v314
        %v426 = vunpack.c.l.b16 %v315
        %v427 = vunpack.c.h.b16 %v315
        %v428 = vunpack.c.l.b16 %v316
        %v429 = vunpack.c.h.b16 %v316
        %v430 = vunpack.c.l.b16 %v317
        %v431 = vunpack.c.h.b16 %v317
        %v432 = vunpack.c.l.b16 %v318
        %v433 = vunpack.c.h.b16 %v318
        %v434 = vunpack.c.l.b16 %v319
        %v435 = vunpack.c.h.b16 %v319
        %v436 = vunpack.c.l.b16 %v320
        %v437 = vunpack.c.h.b16 %v320
        %v438 = vunpack.c.l.b16 %v321
        %v439 = vunpack.c.h.b16 %v321
        %v440 = vpack.c.b16 %v378, %v376
        %v441 = vpack.c.b16 %v379, %v377
        %v442 = vpack.c.b16 %v382, %v380
        %v443 = vpack.c.b16 %v383, %v381
        %v444 = vpack.c.b16 %v386, %v384
        %v445 = vpack.c.b16 %v387, %v385
        %v446 = vpack.c.b16 %v390, %v388
        %v447 = vpack.c.b16 %v391, %v389
        %v448 = vpack.c.b16 %v394, %v392
        %v449 = vpack.c.b16 %v395, %v393
        %v450 = vpack.c.b16 %v398, %v396
        %v451 = vpack.c.b16 %v399, %v397
        %v452 = vpack.c.b16 %v402, %v400
        %v453 = vpack.c.b16 %v403, %v401
        %v454 = vpack.c.b16 %v406, %v404
        %v455 = vpack.c.b16 %v407, %v405
        %v456 = vpack.c.b16 %v410, %v408
        %v457 = vpack.c.b16 %v411, %v409
        %v458 = vpack.c.b16 %v414, %v412
        %v459 = vpack.c.b16 %v415, %v413
        %v460 = vpack.c.b16 %v418, %v416
        %v461 = vpack.c.b16 %v419, %v417
        %v462 = vpack.c.b16 %v422, %v420
        %v463 = vpack.c.b16 %v423, %v421
        %v464 = vpack.c.b16 %v426, %v424
        %v465 = vpack.c.b16 %v427, %v425
        %v466 = vpack.c.b16 %v430, %v428
        %v467 = vpack.c.b16 %v431, %v429
        %v468 = vpack.c.b16 %v434, %v432
        %v469 = vpack.c.b16 %v435, %v433
        %v470 = vpack.c.b16 %v438, %v436
        %v471 = vpack.c.b16 %v439, %v437
        %504 = vmatprep.subr.bf16.mxu0 %v441
        %505 = vmatpush1.bf16.msra.mxu0 %v440
        %506 = vmatprep.subr.bf16.mxu0 %v443
        %507 = vmatpush1.bf16.msra.mxu0 %v442
        %508 = vmatprep.subr.bf16.mxu0 %v445
        %509 = vmatpush1.bf16.msra.mxu0 %v444
        %510 = vmatprep.subr.bf16.mxu0 %v447
        %511 = vmatpush1.bf16.msra.mxu0 %v446
        %512 = vmatprep.subr.bf16.mxu0 %v449
        %513 = vmatpush1.bf16.msra.mxu0 %v448
        %514 = vmatprep.subr.bf16.mxu0 %v451
        %515 = vmatpush1.bf16.msra.mxu0 %v450
        %516 = vmatprep.subr.bf16.mxu0 %v453
        %517 = vmatpush1.bf16.msra.mxu0 %v452
        %518 = vmatprep.subr.bf16.mxu0 %v455
        %519 = vmatpush1.bf16.msra.mxu0 %v454
        %520 = vmatprep.subr.bf16.mxu0 %v457
        %521 = vmatpush1.bf16.msra.mxu0 %v456
        %522 = vmatprep.subr.bf16.mxu0 %v459
        %523 = vmatpush1.bf16.msra.mxu0 %v458
        %524 = vmatprep.subr.bf16.mxu0 %v461
        %525 = vmatpush1.bf16.msra.mxu0 %v460
        %526 = vmatprep.subr.bf16.mxu0 %v463
        %527 = vmatpush1.bf16.msra.mxu0 %v462
        %528 = vmatprep.subr.bf16.mxu0 %v465
        %529 = vmatpush1.bf16.msra.mxu0 %v464
        %530 = vmatprep.subr.bf16.mxu0 %v467
        %531 = vmatpush1.bf16.msra.mxu0 %v466
        %532 = vmatprep.subr.bf16.mxu0 %v469
        %533 = vmatpush1.bf16.msra.mxu0 %v468
        %534 = vmatprep.subr.bf16.mxu0 %v471
        %535 = vmatpush1.bf16.msra.mxu0 %v470
        %536 = vmatprep.mubr.bf16.mxu0 %v341
        %537 = vmatmul.mubr.bf16.gmra.mrb[0].mxu0 %v340
        %v538 = vpop.f32.mrb[0].mxu0
        %v539 = vadd.f32 %v327, %v538
        %v540 = vpop.f32.mrb[0].mxu0
        %v541 = vadd.f32 %v331, %v540
        %v542 = vpop.f32.mrb[0].mxu0
        %v543 = vadd.f32 %v327, %v542
        %v544 = vpop.f32.mrb[0].mxu0
        %v545 = vadd.f32 %v331, %v544
        %546 = vdwg.mxu0
        %v547 = vmax.f32 %v539, %v541
        %548 = vmax.xlane.f32.xlu0 %v547
        %v549 = vpop.xlane.xlu0 %548
        %v550 = vmax.f32 %v543, %v545
        %551 = vmax.xlane.f32.xlu0 %v550
        %v552 = vpop.xlane.xlu0 %551
        %s553 = smul.u32 %s28, 256
        %v554 = vsub.f32 %v539, %v549
        %v555 = vsub.f32 %v541, %v549
        %v556 = vsub.f32 %v543, %v552
        %v557 = vsub.f32 %v545, %v552
        %v558 = vmul.f32 %v554, 1.442695
        %v559 = vpow.pop %v558
        %v560 = vmul.f32 %v555, 1.442695
        %v561 = vpow.pop %v560
        %v562 = vmul.f32 %v556, 1.442695
        %v563 = vpow.pop %v562
        %v564 = vmul.f32 %v557, 1.442695
        %v565 = vpow.pop %v564
        %s566 = sshra.s32 %s553, 7
        %s567 = sand.u32 %s553, 127
        %s568 = smul.addr %s566, 8
        %s569 = scalar_lea.vmem %s276, %s568 [#allocation9]
        %570 = vst [vmem:[%s569] sm:$0xff] %v559
        %571 = vst [vmem:[%s569 + $0x8] sm:$0xff] %v561
        %572 = vst [vmem:[%s569 + $0x40] sm:$0xff] %v563
        %573 = vst [vmem:[%s569 + $0x48] sm:$0xff] %v565
        %v574 = vlaneseq
        %v575 = vand.u32 %v574, 127
        %v576 = vstv %s28
        %vm577 = vcmp.eq.s32.totalorder %v575, %v576
        %v578 = vld [vmem:[#allocation2] sm:$0xff]
        %v579 = vld [vmem:[#allocation2 + $0x8] sm:$0xff]
        %v580 = vsel %vm577, %v549, %v578
        %v581 = vsel %vm577, %v552, %v579
        %vm582 = vcmask 31744
        %583 = vst.msk [vmem:[#allocation2] sm:$0xff] %vm582, %v580
        %584 = vst.msk [vmem:[#allocation2 + $0x8] sm:$0xff] %vm582, %v581
        %p585 = scmp.eq.s32.totalorder %s28, 3
        // Predicated region
        $region49: #{tpu_custom_call.1} parent=31 // pred_check
          %p586 = pneg %p585
        $region50: #{tpu_custom_call.1} parent=31 // pred_check_branch
          %588 = sbr.rel (%p586) target = $region52
        $region51: #{tpu_custom_call.1} parent=31 // pred_region
          %v589 = vld [vmem:[#allocation2] sm:$0xff]
          %v590 = vld [vmem:[#allocation2 + $0x8] sm:$0xff]
          %v591 = vsel %vm582, %v589, -inf
          %592 = vmax.xlane.f32.xlu0 %v591
          %v593 = vpop.xlane.xlu0 %592
          %v594 = vsel %vm582, %v590, -inf
          %595 = vmax.xlane.f32.xlu0 %v594
          %v596 = vpop.xlane.xlu0 %595
          %v597 = vsub.f32 %v589, %v593
          %v598 = vsub.f32 %v590, %v596
          %v599 = vmul.f32 %v597, 1.442695
          %v600 = vpow.pop %v599
          %v601 = vmul.f32 %v598, 1.442695
          %v602 = vpow.pop %v601
          %v603 = vld [vmem:[%s276] sm:$0xff]
          %v604 = vld [vmem:[%s276 + $0x8] sm:$0xff]
          %v605 = vld [vmem:[%s276 + $0x40] sm:$0xff]
          %v606 = vld [vmem:[%s276 + $0x48] sm:$0xff]
          %v607 = vadd.f32 %v603, %v604
          %608 = vadd.xlane.f32.xlu0 %v607
          %v609 = vpop.xlane.xlu0 %608
          %v610 = vadd.f32 %v605, %v606
          %611 = vadd.xlane.f32.xlu0 %v610
          %v612 = vpop.xlane.xlu0 %611
          %v613 = vmul.f32 %v600, %v609
          %v614 = vmul.f32 %v602, %v612
          %v615 = vadd.f32 %v613, 0.0
          %v616 = vadd.f32 %v614, 0.0
          %v617 = vld [vmem:[%s276 + $0x10] sm:$0xff]
          %v618 = vld [vmem:[%s276 + $0x18] sm:$0xff]
          %v619 = vld [vmem:[%s276 + $0x50] sm:$0xff]
          %v620 = vld [vmem:[%s276 + $0x58] sm:$0xff]
          %v621 = vadd.f32 %v617, %v618
          %622 = vadd.xlane.f32.xlu0 %v621
          %v623 = vpop.xlane.xlu0 %622
          %v624 = vadd.f32 %v619, %v620
          %625 = vadd.xlane.f32.xlu0 %v624
          %v626 = vpop.xlane.xlu0 %625
          %v627 = vmul.f32 %v600, %v623
          %v628 = vmul.f32 %v602, %v626
          %631 = vrot.lane.b32.xlu0 %v627, 127
          %v632 = vpop.permute.xlu0 %631
          %633 = vrot.lane.b32.xlu0 %v628, 127
          %v634 = vpop.permute.xlu0 %633
          %v637 = vadd.f32 %v615, %v632
          %v638 = vadd.f32 %v616, %v634
          %v639 = vld [vmem:[%s276 + $0x20] sm:$0xff]
          %v640 = vld [vmem:[%s276 + $0x28] sm:$0xff]
          %v641 = vld [vmem:[%s276 + $0x60] sm:$0xff]
          %v642 = vld [vmem:[%s276 + $0x68] sm:$0xff]
          %v643 = vadd.f32 %v639, %v640
          %644 = vadd.xlane.f32.xlu0 %v643
          %v645 = vpop.xlane.xlu0 %644
          %v646 = vadd.f32 %v641, %v642
          %647 = vadd.xlane.f32.xlu0 %v646
          %v648 = vpop.xlane.xlu0 %647
          %v649 = vmul.f32 %v600, %v645
          %v650 = vmul.f32 %v602, %v648
          %653 = vrot.lane.b32.xlu0 %v649, 126
          %v654 = vpop.permute.xlu0 %653
          %655 = vrot.lane.b32.xlu0 %v650, 126
          %v656 = vpop.permute.xlu0 %655
          %v659 = vadd.f32 %v637, %v654
          %v660 = vadd.f32 %v638, %v656
          %v661 = vld [vmem:[%s276 + $0x30] sm:$0xff]
          %v662 = vld [vmem:[%s276 + $0x38] sm:$0xff]
          %v663 = vld [vmem:[%s276 + $0x70] sm:$0xff]
          %v664 = vld [vmem:[%s276 + $0x78] sm:$0xff]
          %v665 = vadd.f32 %v661, %v662
          %666 = vadd.xlane.f32.xlu0 %v665
          %v667 = vpop.xlane.xlu0 %666
          %v668 = vadd.f32 %v663, %v664
          %669 = vadd.xlane.f32.xlu0 %v668
          %v670 = vpop.xlane.xlu0 %669
          %v671 = vmul.f32 %v600, %v667
          %v672 = vmul.f32 %v602, %v670
          %675 = vrot.lane.b32.xlu0 %v671, 125
          %v676 = vpop.permute.xlu0 %675
          %677 = vrot.lane.b32.xlu0 %v672, 125
          %v678 = vpop.permute.xlu0 %677
          %v681 = vadd.f32 %v659, %v676
          %v682 = vadd.f32 %v660, %v678
          %v683 = vrcp.pop %v681
          %v684 = vmul.f32 1.0, %v683
          %v685 = vrcp.pop %v682
          %v686 = vmul.f32 1.0, %v685
          %v687 = vmul.f32 %v600, %v684
          %v688 = vmul.f32 %v602, %v686
          %690 = vset.pattern.permute.xlu0 0
          %691 = vperm.xlu0 %690, %v687
          %v692 = vpop.permute.xlu0 %691
          %695 = vset.pattern.permute.xlu0 0
          %696 = vperm.xlu0 %695, %v688
          %v697 = vpop.permute.xlu0 %696
          %v699 = vmul.f32 %v603, %v692
          %v700 = vmul.f32 %v604, %v692
          %v701 = vmul.f32 %v605, %v697
          %v702 = vmul.f32 %v606, %v697
          %703 = vst [vmem:[%s276] sm:$0xff] %v699
          %704 = vst [vmem:[%s276 + $0x8] sm:$0xff] %v700
          %705 = vst [vmem:[%s276 + $0x40] sm:$0xff] %v701
          %706 = vst [vmem:[%s276 + $0x48] sm:$0xff] %v702
          %709 = vrot.lane.b32.xlu0 %v684, 1
          %v710 = vpop.permute.xlu0 %709
          %711 = vrot.lane.b32.xlu0 %v686, 1
          %v712 = vpop.permute.xlu0 %711
          %v715 = vmul.f32 %v600, %v710
          %v716 = vmul.f32 %v602, %v712
          %v717 = vld [vmem:[%s276 + $0x10] sm:$0xff]
          %v718 = vld [vmem:[%s276 + $0x18] sm:$0xff]
          %v719 = vld [vmem:[%s276 + $0x50] sm:$0xff]
          %v720 = vld [vmem:[%s276 + $0x58] sm:$0xff]
          %722 = vset.pattern.permute.xlu0 1
          %723 = vperm.xlu0 %722, %v715
          %v724 = vpop.permute.xlu0 %723
          %727 = vset.pattern.permute.xlu0 1
          %728 = vperm.xlu0 %727, %v716
          %v729 = vpop.permute.xlu0 %728
          %v731 = vmul.f32 %v717, %v724
          %v732 = vmul.f32 %v718, %v724
          %v733 = vmul.f32 %v719, %v729
          %v734 = vmul.f32 %v720, %v729
          %735 = vst [vmem:[%s276 + $0x10] sm:$0xff] %v731
          %736 = vst [vmem:[%s276 + $0x18] sm:$0xff] %v732
          %737 = vst [vmem:[%s276 + $0x50] sm:$0xff] %v733
          %738 = vst [vmem:[%s276 + $0x58] sm:$0xff] %v734
          %739 = vrot.lane.b32.xlu0 %v684, 2
          %v740 = vpop.permute.xlu0 %739
          %741 = vrot.lane.b32.xlu0 %v686, 2
          %v742 = vpop.permute.xlu0 %741
          %v745 = vmul.f32 %v600, %v740
          %v746 = vmul.f32 %v602, %v742
          %v747 = vld [vmem:[%s276 + $0x20] sm:$0xff]
          %v748 = vld [vmem:[%s276 + $0x28] sm:$0xff]
          %v749 = vld [vmem:[%s276 + $0x60] sm:$0xff]
          %v750 = vld [vmem:[%s276 + $0x68] sm:$0xff]
          %752 = vset.pattern.permute.xlu0 2
          %753 = vperm.xlu0 %752, %v745
          %v754 = vpop.permute.xlu0 %753
          %757 = vset.pattern.permute.xlu0 2
          %758 = vperm.xlu0 %757, %v746
          %v759 = vpop.permute.xlu0 %758
          %v761 = vmul.f32 %v747, %v754
          %v762 = vmul.f32 %v748, %v754
          %v763 = vmul.f32 %v749, %v759
          %v764 = vmul.f32 %v750, %v759
          %765 = vst [vmem:[%s276 + $0x20] sm:$0xff] %v761
          %766 = vst [vmem:[%s276 + $0x28] sm:$0xff] %v762
          %767 = vst [vmem:[%s276 + $0x60] sm:$0xff] %v763
          %768 = vst [vmem:[%s276 + $0x68] sm:$0xff] %v764
          %769 = vrot.lane.b32.xlu0 %v684, 3
          %v770 = vpop.permute.xlu0 %769
          %771 = vrot.lane.b32.xlu0 %v686, 3
          %v772 = vpop.permute.xlu0 %771
          %v775 = vmul.f32 %v600, %v770
          %v776 = vmul.f32 %v602, %v772
          %v777 = vld [vmem:[%s276 + $0x30] sm:$0xff]
          %v778 = vld [vmem:[%s276 + $0x38] sm:$0xff]
          %v779 = vld [vmem:[%s276 + $0x70] sm:$0xff]
          %v780 = vld [vmem:[%s276 + $0x78] sm:$0xff]
          %782 = vset.pattern.permute.xlu0 3
          %783 = vperm.xlu0 %782, %v775
          %v784 = vpop.permute.xlu0 %783
          %787 = vset.pattern.permute.xlu0 3
          %788 = vperm.xlu0 %787, %v776
          %v789 = vpop.permute.xlu0 %788
          %v791 = vmul.f32 %v777, %v784
          %v792 = vmul.f32 %v778, %v784
          %v793 = vmul.f32 %v779, %v789
          %v794 = vmul.f32 %v780, %v789
          %795 = vst [vmem:[%s276 + $0x30] sm:$0xff] %v791
          %796 = vst [vmem:[%s276 + $0x38] sm:$0xff] %v792
          %797 = vst [vmem:[%s276 + $0x70] sm:$0xff] %v793
          %798 = vst [vmem:[%s276 + $0x78] sm:$0xff] %v794
        $region52: #{tpu_custom_call.1} parent=31 // pred_fallthru
          _
        %s799 = sand.u32 %s121, 1
        %s800 = scalar_lea.sflag [#allocation5], %s799
        %s801 = sand.u32 %s121, 1
        %s802 = smul.addr %s801, 128
        %s803 = scalar_lea.vmem [#allocation9], %s802
        // Predicated region
        $region53: #{tpu_custom_call.1} parent=31 // pred_check
          %p804 = pneg %p131
        $region54: #{tpu_custom_call.1} parent=31 // pred_check_branch
          %806 = sbr.rel (%p804) target = $region56
        $region55: #{tpu_custom_call.1} parent=31 // pred_region
          %s807 = smul.u32 2, %s27
          %s809 = ssub.s32 2048, 2048
          %810 = vsyncadd %s800, %s809
          %s811 = smul.addr %s807, 8
          %s812 = smul.addr %s811, 128
          %s813 = scalar_lea.hbm %s3, %s812
          %s814 = sshll.u32 %s803, 4
          %s815 = int_to_ptr.vmem [resolvable:$true] %s814
          %820 = dma.vmem_to_hbm [thread:$0]  %s815, 2048, %s813, %s800, 1024, 1024, 64
        $region56: #{tpu_custom_call.1} parent=31 // pred_fallthru
          _
      $region32: #{tpu_custom_call.1} parent=5 // pred_fallthru
        _
      %p821 = scmp.le.s32.totalorder 2, %s18
      // Predicated region
      $region57: #{tpu_custom_call.1} parent=5 // pred_check
        %p822 = pneg %p821
      $region58: #{tpu_custom_call.1} parent=5 // pred_check_branch
        %824 = sbr.rel (%p822) target = $region60
      $region59: #{tpu_custom_call.1} parent=5 // pred_region
        %s825 = ssub.s32 %s18, 2
        // Predicated region
        $region61: #{tpu_custom_call.1} parent=59 // pred_check
          %p826 = pneg %p137
        $region62: #{tpu_custom_call.1} parent=59 // pred_check_branch
          %828 = sbr.rel (%p826) target = $region64
        $region63: #{tpu_custom_call.1} parent=59 // pred_region
          %s829 = sand.u32 %s122, 1
          %s830 = scalar_lea.sflag [#allocation5], %s829
          %s831 = sand.u32 %s122, 1
          %s832 = smul.addr %s831, 128
          %s833 = scalar_lea.vmem [#allocation9], %s832
          %834 = dma.done %s830, 2048
        $region64: #{tpu_custom_call.1} parent=59 // pred_fallthru
          _
      $region60: #{tpu_custom_call.1} parent=5 // pred_fallthru
        _
    $region6: #{tpu_custom_call.1} parent=1 // loop_footer
      %s22 = sadd.s32 1, %s18
    $region7: #{tpu_custom_call.1} parent=1 // loop_footer_branch
      %17 = sbr.rel target = $region3
    $region8: #{tpu_custom_call.1} parent=1 // loop_exit
      _
    %835 = vsyncpa [#allocation4], 1
    %s836 = scalar_lea.sflag [#allocation4], 1
    %837 = vsyncpa %s836, 1
    %838 = vsyncpa [#allocation7], 1
    %s839 = scalar_lea.sflag [#allocation7], 1
    %840 = vsyncpa %s839, 1
    %841 = vsyncpa [#allocation5], 1
    %s842 = scalar_lea.sflag [#allocation5], 1
    %843 = vsyncpa %s842, 1

</llo_original>
